<compile_context>
chip_gen: v5e
topology: v5e:2x2
jax: 0.10.0
libtpu: 0.0.40
codegen_flags: <defaults>
</compile_context>

<pallas_src>
import functools

import jax
import jax.numpy as jnp
import numpy as np
from jax.experimental import pallas as pl
from jax.experimental.pallas import tpu as pltpu

EPS = 1e-5              # InstanceNorm2d default eps
NEG_SLOPE = 0.2         # LeakyReLU slope
_CENTER = 4             # index of the (0,0) tap in row-major 3x3 tap order
_PER_TAP_MIN_CIN = 64   # Cin threshold: switch to per-tap matmul accumulation


# ---------------------------------------------------------------- kernel math
def _instance_norm(x):
    """InstanceNorm2d (affine=False) in (C, H*W) layout, one-pass statistics.

    var = E[x^2] - mean^2 (single traversal; eps guards tiny negative round-off).
    NOTE: reduces over ALL lanes -> only correct because the lane dim is exactly
    H*W (asserted in the wrapper); padded lanes would silently bias the stats.
    """
    inv_n = 1.0 / x.shape[-1]
    mean = jnp.sum(x, axis=1, keepdims=True) * inv_n
    ex2 = jnp.sum(x * x, axis=1, keepdims=True) * inv_n
    var = ex2 - mean * mean
    return (x - mean) * jax.lax.rsqrt(var + EPS)


def _leaky_relu(x):
    return jnp.where(x >= 0, x, NEG_SLOPE * x)


def _conv3x3(x, w_mat, b_col, offsets, masks):
    """3x3 conv (padding=1, stride=1) on a flattened (C, L) image.

    x:       (C, L) f32, spatial flattened on the lane axis
    w_mat:   (Cout, 9*C) bf16, columns ordered (kh, kw, cin)
    b_col:   (Cout, 1) f32
    offsets: 9 static lane offsets of the taps (dh*W + dw, possibly dilated)
    masks:   (9, L) f32 host-precomputed 0/1 border masks (center row all-ones
             and skipped entirely)

    Cin <  64: one fused im2col matmul (K = 9*Cin keeps the MXU reasonably fed).
    Cin >= 64: 9 per-tap (Cout, Cin) @ (Cin, L) matmuls accumulated in f32 - no
               (9*C, L) patches buffer (the largest VMEM consumer at scale).
    """
    C, L = x.shape

    def rolled(t):
        off = offsets[t]
        return x if off == 0 else pltpu.roll(x, shift=(-off) % L, axis=1)

    if C < _PER_TAP_MIN_CIN:
        pieces = []
        for t in range(9):
            s = rolled(t)
            if t != _CENTER:                       # center tap needs no mask
                s = s * masks[t:t + 1, :]          # 0/1 multiply, not a select
            pieces.append(s)
        patches = jnp.concatenate(pieces, axis=0).astype(jnp.bfloat16)   # (9C, L)
        acc = jnp.dot(w_mat, patches, preferred_element_type=jnp.float32)
    else:
        acc = jnp.zeros((w_mat.shape[0], L), jnp.float32)
        for t in range(9):
            tap = rolled(t).astype(jnp.bfloat16)
            if t != _CENTER:
                tap = tap * masks[t:t + 1, :].astype(jnp.bfloat16)   # bf16 0/1 mult
            w_tap = w_mat[:, t * C:(t + 1) * C]
            acc = acc + jnp.dot(w_tap, tap, preferred_element_type=jnp.float32)
    return acc + b_col


# ------------------------------------------------------------------- kernel
def _enc_block_kernel(H, W, x_ref, w1_ref, b1_ref, w2_ref, b2_ref,
                      wd_ref, bd_ref, mfull_ref, mpool_ref, r_ref, y_ref):
    """Fused UnetBasicBlock + DEC + AvgPool2d(2) + DEC for one batch element."""
    L = H * W
    offs_full = tuple(dh * W + dw for dh in (-1, 0, 1) for dw in (-1, 0, 1))
    offs_pool = tuple(2 * o for o in offs_full)   # 2-dilated taps == 3x3 conv on
                                                  # the stride-2 pooled lattice

    w1, b1 = w1_ref[...], b1_ref[...]
    w2, b2 = w2_ref[...], b2_ref[...]
    wd, bd = wd_ref[...], bd_ref[...]
    mfull = mfull_ref[...]
    mpool = mpool_ref[...]

    x = x_ref[0]                                               # (Cp, L) f32
    h = _instance_norm(x)
    h = _leaky_relu(_conv3x3(h, w1, b1, offs_full, mfull))     # Cin -> F
    h = _instance_norm(h)
    h = _leaky_relu(_conv3x3(h, w2, b2, offs_full, mfull))     # F  -> F
    # TODO(synk): DEC source not provided; using its re-parameterized single
    # 3x3-conv deployment form (identical weights for both DEC applications).
    r = _conv3x3(h, wd, bd, offs_full, mfull)                  # DEC, full res
    r_ref[0] = r

    # AvgPool2d(2) as separable shift+add: pooled values land on the stride-2
    # anchor lanes p = (2*yo)*W + 2*xo; other lanes hold finite don't-care data
    # that the dilated-tap conv never routes into an anchor output and that the
    # wrapper's strided slice discards.  (No wrap-around reaches an anchor.)
    s = r + pltpu.roll(r, shift=L - 1, axis=1)       # + right neighbour
    s = s + pltpu.roll(s, shift=L - W, axis=1)       # + row below
    pooled = s * 0.25
    y_ref[0] = _conv3x3(pooled, wd, bd, offs_pool, mpool)      # DEC at half res


# ------------------------------------------------------------------- wrapper
def _conv_weight_matrix(w_hwio, cin_pad):
    """(3,3,Cin,Cout) HWIO -> (Cout, 9*cin_pad) bf16, columns ordered (kh,kw,cin)."""
    kh, kw, cin, cout = w_hwio.shape
    w = w_hwio
    if cin_pad != cin:
        w = jnp.pad(w, ((0, 0), (0, 0), (0, cin_pad - cin), (0, 0)))
    w = jnp.transpose(w, (3, 0, 1, 2)).reshape(cout, kh * kw * cin_pad)
    return w.astype(jnp.bfloat16)


def _border_masks(H, W, dilation):
    """Host-precomputed (9, H*W) 0/1 f32 masks for 3x3 taps at `dilation`."""
    p = np.arange(H * W)
    y, x = p // W, p % W
    rows = []
    for dh in (-1, 0, 1):
        for dw in (-1, 0, 1):
            valid = ((y + dilation * dh >= 0) & (y + dilation * dh < H) &
                     (x + dilation * dw >= 0) & (x + dilation * dw < W))
            rows.append(valid)
    return jnp.asarray(np.stack(rows).astype(np.float32))


def unet_enc_block_forward(x_nchw, params):
    """Forward of UNetEncBlock. Takes/returns NCHW like PyTorch; returns (y, r)."""
    w1, b1 = params["w1"], params["b1"]
    w2, b2 = params["w2"], params["b2"]
    wd, bd = params["wd"], params["bd"]

    B, Cin, H, W = x_nchw.shape
    F = w1.shape[-1]
    Hh, Wh = H // 2, W // 2
    assert H % 2 == 0 and W % 2 == 0 and (H * W) % 128 == 0, \
        "this kernel assumes H*W is a multiple of 128 (instance norm over lanes)"
    L = H * W

    Cp = ((Cin + 7) // 8) * 8                    # pad channels to a sublane group
    x = x_nchw.reshape(B, Cin, L).astype(jnp.float32)
    if Cp != Cin:
        x = jnp.pad(x, ((0, 0), (0, Cp - Cin), (0, 0)))   # zero channels are inert

    w1m = _conv_weight_matrix(w1, Cp)
    w2m = _conv_weight_matrix(w2, F)
    wdm = _conv_weight_matrix(wd, F)
    b1c = b1.reshape(F, 1).astype(jnp.float32)
    b2c = b2.reshape(F, 1).astype(jnp.float32)
    bdc = bd.reshape(F, 1).astype(jnp.float32)
    mfull = _border_masks(H, W, 1)               # full-res conv masks
    mpool = _border_masks(H, W, 2)               # dilated masks for pooled conv

    def _const(shape):
        n = len(shape)
        return pl.BlockSpec(shape, lambda b, n=n: (0,) * n)

    r_flat, y_sparse = pl.pallas_call(
        functools.partial(_enc_block_kernel, H, W),
        out_shape=(jax.ShapeDtypeStruct((B, F, L), jnp.float32),
                   jax.ShapeDtypeStruct((B, F, L), jnp.float32)),
        grid=(B,),
        in_specs=[
            pl.BlockSpec((1, Cp, L), lambda b: (b, 0, 0)),
            _const(w1m.shape), _const(b1c.shape),
            _const(w2m.shape), _const(b2c.shape),
            _const(wdm.shape), _const(bdc.shape),
            _const(mfull.shape), _const(mpool.shape),
        ],
        out_specs=(pl.BlockSpec((1, F, L), lambda b: (b, 0, 0)),
                   pl.BlockSpec((1, F, L), lambda b: (b, 0, 0))),
        compiler_params=pltpu.CompilerParams(
            dimension_semantics=("parallel",),
            # explicit scoped-VMEM cap: tiny at test shapes, and above v5e's
            # 16 MiB default; revisit together with row-strip tiling at scale.
            vmem_limit_bytes=32 * 1024 * 1024),
    )(x, w1m, b1c, w2m, b2c, wdm, bdc, mfull, mpool)

    # r is already channel-first / lane-dense: reshape only, no transpose.
    r = r_flat.reshape(B, F, H, W)
    # y was produced on the stride-2 anchor lanes of the full-res grid; compact
    # with one strided slice outside the kernel (plain XLA op on small data).
    y = y_sparse.reshape(B, F, H, W)[:, :, ::2, ::2]
    return y, r


# ------------------------------------------------------------ plain-JAX reference
def _reference_forward(x, params):
    def inorm(v):
        m = v.mean(axis=(2, 3), keepdims=True)
        var = jnp.square(v - m).mean(axis=(2, 3), keepdims=True)
        return (v - m) * jax.lax.rsqrt(var + EPS)

    def act(v):
        return jnp.where(v >= 0, v, NEG_SLOPE * v)

    def conv(v, w, b):
        o = jax.lax.conv_general_dilated(
            v, w, window_strides=(1, 1), padding=((1, 1), (1, 1)),
            dimension_numbers=("NCHW", "HWIO", "NCHW"),
            precision=jax.lax.Precision.HIGHEST)
        return o + b.reshape(1, -1, 1, 1)

    h = act(conv(inorm(x), params["w1"], params["b1"]))
    h = act(conv(inorm(h), params["w2"], params["b2"]))
    r = conv(h, params["wd"], params["bd"])
    B, F, H, W = r.shape
    y0 = r.reshape(B, F, H // 2, 2, W // 2, 2).mean(axis=(3, 5))
    y = conv(y0, params["wd"], params["bd"])
    return y, r


# ---------------------------------------------------------------------- main
if __name__ == "__main__":
    B, C, H, W = 2, 4, 16, 16       # input_shape = (C, H, W), batch = 2
    F = 8                           # features

    key = jax.random.PRNGKey(0)
    ks = jax.random.split(key, 7)
    params = {
        "w1": jax.random.normal(ks[0], (3, 3, C, F), jnp.float32) * 0.1,  # HWIO
        "b1": jax.random.normal(ks[1], (F,), jnp.float32) * 0.1,
        "w2": jax.random.normal(ks[2], (3, 3, F, F), jnp.float32) * 0.1,
        "b2": jax.random.normal(ks[3], (F,), jnp.float32) * 0.1,
        "wd": jax.random.normal(ks[4], (3, 3, F, F), jnp.float32) * 0.1,  # DEC
        "bd": jax.random.normal(ks[5], (F,), jnp.float32) * 0.1,
    }
    x = jax.random.normal(ks[6], (B, C, H, W), jnp.float32)               # NCHW

    y, r = jax.jit(unet_enc_block_forward)(x, params)
    jax.block_until_ready((y, r))

    assert y.shape == (B, F, H // 2, W // 2), y.shape
    assert r.shape == (B, F, H, W), r.shape
    assert y.dtype == jnp.float32 and r.dtype == jnp.float32

    # numerical sanity check vs plain-JAX reference (kernel uses bf16 MXU
    # operands with f32 accumulation, hence the loose absolute tolerance).
    y_ref, r_ref = jax.jit(_reference_forward)(x, params)
    assert float(jnp.max(jnp.abs(r - r_ref))) < 5e-2
    assert float(jnp.max(jnp.abs(y - y_ref))) < 5e-2

    print("KERNEL_OK")
</pallas_src>

<mosaic_0001>
module attributes {stable_mosaic.version = 11 : i64} {
  func.func @_enc_block_kernel(%arg0: i32, %arg1: memref<1x8x256xf32, #tpu.memory_space<vmem>>, %arg2: memref<8x72xbf16, #tpu.memory_space<vmem>>, %arg3: memref<8x1xf32, #tpu.memory_space<vmem>>, %arg4: memref<8x72xbf16, #tpu.memory_space<vmem>>, %arg5: memref<8x1xf32, #tpu.memory_space<vmem>>, %arg6: memref<8x72xbf16, #tpu.memory_space<vmem>>, %arg7: memref<8x1xf32, #tpu.memory_space<vmem>>, %arg8: memref<9x256xf32, #tpu.memory_space<vmem>>, %arg9: memref<9x256xf32, #tpu.memory_space<vmem>>, %arg10: memref<1x8x256xf32, #tpu.memory_space<vmem>>, %arg11: memref<1x8x256xf32, #tpu.memory_space<vmem>>) attributes {dimension_semantics = [#tpu.dimension_semantics<parallel>], iteration_bounds = array<i64: 2>, scalar_prefetch = 0 : i64, scratch_operands = 0 : i64, tpu.core_type = #tpu.core_type<tc>, window_params = [{transform_indices = @transform_0, window_bounds = array<i64: 1, 8, 256>}, {pipeline_mode = #tpu.pipeline_mode<synchronous>, transform_indices = @transform_1, window_bounds = array<i64: 8, 72>}, {pipeline_mode = #tpu.pipeline_mode<synchronous>, transform_indices = @transform_2, window_bounds = array<i64: 8, 1>}, {pipeline_mode = #tpu.pipeline_mode<synchronous>, transform_indices = @transform_3, window_bounds = array<i64: 8, 72>}, {pipeline_mode = #tpu.pipeline_mode<synchronous>, transform_indices = @transform_4, window_bounds = array<i64: 8, 1>}, {pipeline_mode = #tpu.pipeline_mode<synchronous>, transform_indices = @transform_5, window_bounds = array<i64: 8, 72>}, {pipeline_mode = #tpu.pipeline_mode<synchronous>, transform_indices = @transform_6, window_bounds = array<i64: 8, 1>}, {pipeline_mode = #tpu.pipeline_mode<synchronous>, transform_indices = @transform_7, window_bounds = array<i64: 9, 256>}, {pipeline_mode = #tpu.pipeline_mode<synchronous>, transform_indices = @transform_8, window_bounds = array<i64: 9, 256>}, {transform_indices = @transform_9, window_bounds = array<i64: 1, 8, 256>}, {transform_indices = @transform_10, window_bounds = array<i64: 1, 8, 256>}]} {
    %c0 = arith.constant 0 : index
    %c0_0 = arith.constant 0 : index
    %0 = vector.load %arg2[%c0, %c0_0] : memref<8x72xbf16, #tpu.memory_space<vmem>>, vector<8x72xbf16>
    %c0_1 = arith.constant 0 : index
    %c0_2 = arith.constant 0 : index
    %1 = vector.load %arg3[%c0_1, %c0_2] : memref<8x1xf32, #tpu.memory_space<vmem>>, vector<8x1xf32>
    %c0_3 = arith.constant 0 : index
    %c0_4 = arith.constant 0 : index
    %2 = vector.load %arg4[%c0_3, %c0_4] : memref<8x72xbf16, #tpu.memory_space<vmem>>, vector<8x72xbf16>
    %c0_5 = arith.constant 0 : index
    %c0_6 = arith.constant 0 : index
    %3 = vector.load %arg5[%c0_5, %c0_6] : memref<8x1xf32, #tpu.memory_space<vmem>>, vector<8x1xf32>
    %c0_7 = arith.constant 0 : index
    %c0_8 = arith.constant 0 : index
    %4 = vector.load %arg6[%c0_7, %c0_8] : memref<8x72xbf16, #tpu.memory_space<vmem>>, vector<8x72xbf16>
    %c0_9 = arith.constant 0 : index
    %c0_10 = arith.constant 0 : index
    %5 = vector.load %arg7[%c0_9, %c0_10] : memref<8x1xf32, #tpu.memory_space<vmem>>, vector<8x1xf32>
    %c0_11 = arith.constant 0 : index
    %c0_12 = arith.constant 0 : index
    %6 = vector.load %arg8[%c0_11, %c0_12] : memref<9x256xf32, #tpu.memory_space<vmem>>, vector<9x256xf32>
    %c0_13 = arith.constant 0 : index
    %c0_14 = arith.constant 0 : index
    %7 = vector.load %arg9[%c0_13, %c0_14] : memref<9x256xf32, #tpu.memory_space<vmem>>, vector<9x256xf32>
    %c0_15 = arith.constant 0 : index
    %c0_16 = arith.constant 0 : index
    %c0_17 = arith.constant 0 : index
    %8 = vector.load %arg1[%c0_15, %c0_16, %c0_17] : memref<1x8x256xf32, #tpu.memory_space<vmem>>, vector<1x8x256xf32>
    %9 = vector.shape_cast %8 : vector<1x8x256xf32> to vector<8x256xf32>
    %cst = arith.constant dense<0.000000e+00> : vector<8xf32>
    %10 = vector.multi_reduction <add>, %9, %cst [1] : vector<8x256xf32> to vector<8xf32>
    %11 = vector.shape_cast %10 : vector<8xf32> to vector<8x1xf32>
    %cst_18 = arith.constant 3.906250e-03 : f32
    %12 = vector.broadcast %cst_18 : f32 to vector<8x1xf32>
    %13 = arith.mulf %11, %12 : vector<8x1xf32>
    %14 = arith.mulf %9, %9 : vector<8x256xf32>
    %cst_19 = arith.constant dense<0.000000e+00> : vector<8xf32>
    %15 = vector.multi_reduction <add>, %14, %cst_19 [1] : vector<8x256xf32> to vector<8xf32>
    %16 = vector.shape_cast %15 : vector<8xf32> to vector<8x1xf32>
    %cst_20 = arith.constant 3.906250e-03 : f32
    %17 = vector.broadcast %cst_20 : f32 to vector<8x1xf32>
    %18 = arith.mulf %16, %17 : vector<8x1xf32>
    %19 = arith.mulf %13, %13 : vector<8x1xf32>
    %20 = arith.subf %18, %19 : vector<8x1xf32>
    %21 = vector.broadcast %13 : vector<8x1xf32> to vector<8x256xf32>
    %22 = arith.subf %9, %21 : vector<8x256xf32>
    %cst_21 = arith.constant 9.99999974E-6 : f32
    %23 = vector.broadcast %cst_21 : f32 to vector<8x1xf32>
    %24 = arith.addf %20, %23 : vector<8x1xf32>
    %25 = math.rsqrt %24 : vector<8x1xf32>
    %26 = vector.broadcast %25 : vector<8x1xf32> to vector<8x256xf32>
    %27 = arith.mulf %22, %26 : vector<8x256xf32>
    %c17_i32 = arith.constant 17 : i32
    %28 = tpu.dynamic_rotate %27 by %c17_i32 dim 1 : vector<8x256xf32>, i32 -> vector<8x256xf32>
    %29 = vector.extract_strided_slice %6 {offsets = [0, 0], sizes = [1, 256], strides = [1, 1]} : vector<9x256xf32> to vector<1x256xf32>
    %30 = vector.broadcast %29 : vector<1x256xf32> to vector<8x256xf32>
    %31 = arith.mulf %28, %30 : vector<8x256xf32>
    %c16_i32 = arith.constant 16 : i32
    %32 = tpu.dynamic_rotate %27 by %c16_i32 dim 1 : vector<8x256xf32>, i32 -> vector<8x256xf32>
    %33 = vector.extract_strided_slice %6 {offsets = [1, 0], sizes = [1, 256], strides = [1, 1]} : vector<9x256xf32> to vector<1x256xf32>
    %34 = vector.broadcast %33 : vector<1x256xf32> to vector<8x256xf32>
    %35 = arith.mulf %32, %34 : vector<8x256xf32>
    %c15_i32 = arith.constant 15 : i32
    %36 = tpu.dynamic_rotate %27 by %c15_i32 dim 1 : vector<8x256xf32>, i32 -> vector<8x256xf32>
    %37 = vector.extract_strided_slice %6 {offsets = [2, 0], sizes = [1, 256], strides = [1, 1]} : vector<9x256xf32> to vector<1x256xf32>
    %38 = vector.broadcast %37 : vector<1x256xf32> to vector<8x256xf32>
    %39 = arith.mulf %36, %38 : vector<8x256xf32>
    %c1_i32 = arith.constant 1 : i32
    %40 = tpu.dynamic_rotate %27 by %c1_i32 dim 1 : vector<8x256xf32>, i32 -> vector<8x256xf32>
    %41 = vector.extract_strided_slice %6 {offsets = [3, 0], sizes = [1, 256], strides = [1, 1]} : vector<9x256xf32> to vector<1x256xf32>
    %42 = vector.broadcast %41 : vector<1x256xf32> to vector<8x256xf32>
    %43 = arith.mulf %40, %42 : vector<8x256xf32>
    %c255_i32 = arith.constant 255 : i32
    %44 = tpu.dynamic_rotate %27 by %c255_i32 dim 1 : vector<8x256xf32>, i32 -> vector<8x256xf32>
    %45 = vector.extract_strided_slice %6 {offsets = [5, 0], sizes = [1, 256], strides = [1, 1]} : vector<9x256xf32> to vector<1x256xf32>
    %46 = vector.broadcast %45 : vector<1x256xf32> to vector<8x256xf32>
    %47 = arith.mulf %44, %46 : vector<8x256xf32>
    %c241_i32 = arith.constant 241 : i32
    %48 = tpu.dynamic_rotate %27 by %c241_i32 dim 1 : vector<8x256xf32>, i32 -> vector<8x256xf32>
    %49 = vector.extract_strided_slice %6 {offsets = [6, 0], sizes = [1, 256], strides = [1, 1]} : vector<9x256xf32> to vector<1x256xf32>
    %50 = vector.broadcast %49 : vector<1x256xf32> to vector<8x256xf32>
    %51 = arith.mulf %48, %50 : vector<8x256xf32>
    %c240_i32 = arith.constant 240 : i32
    %52 = tpu.dynamic_rotate %27 by %c240_i32 dim 1 : vector<8x256xf32>, i32 -> vector<8x256xf32>
    %53 = vector.extract_strided_slice %6 {offsets = [7, 0], sizes = [1, 256], strides = [1, 1]} : vector<9x256xf32> to vector<1x256xf32>
    %54 = vector.broadcast %53 : vector<1x256xf32> to vector<8x256xf32>
    %55 = arith.mulf %52, %54 : vector<8x256xf32>
    %c239_i32 = arith.constant 239 : i32
    %56 = tpu.dynamic_rotate %27 by %c239_i32 dim 1 : vector<8x256xf32>, i32 -> vector<8x256xf32>
    %57 = vector.extract_strided_slice %6 {offsets = [8, 0], sizes = [1, 256], strides = [1, 1]} : vector<9x256xf32> to vector<1x256xf32>
    %58 = vector.broadcast %57 : vector<1x256xf32> to vector<8x256xf32>
    %59 = arith.mulf %56, %58 : vector<8x256xf32>
    %60 = tpu.concatenate %31, %35, %39, %43, %27, %47, %51, %55, %59 in 0 : vector<8x256xf32>, vector<8x256xf32>, vector<8x256xf32>, vector<8x256xf32>, vector<8x256xf32>, vector<8x256xf32>, vector<8x256xf32>, vector<8x256xf32>, vector<8x256xf32> -> vector<72x256xf32>
    %61 = arith.truncf %60 : vector<72x256xf32> to vector<72x256xbf16>
    %cst_22 = arith.constant dense<0.000000e+00> : vector<8x256xf32>
    %62 = tpu.matmul %0, %61, %cst_22 {dimension_numbers = #tpu.dot_dimension_numbers<[1], [0], [0], [1], [0, 0, 1, 1], [], []>} : vector<8x72xbf16>, vector<72x256xbf16>, vector<8x256xf32> -> vector<8x256xf32>
    %63 = vector.broadcast %1 : vector<8x1xf32> to vector<8x256xf32>
    %64 = arith.addf %62, %63 : vector<8x256xf32>
    %cst_23 = arith.constant 0.000000e+00 : f32
    %65 = vector.broadcast %cst_23 : f32 to vector<8x256xf32>
    %66 = arith.cmpf oge, %64, %65 : vector<8x256xf32>
    %cst_24 = arith.constant 2.000000e-01 : f32
    %67 = vector.broadcast %cst_24 : f32 to vector<8x256xf32>
    %68 = arith.mulf %67, %64 : vector<8x256xf32>
    %69 = arith.select %66, %64, %68 : vector<8x256xi1>, vector<8x256xf32>
    %cst_25 = arith.constant dense<0.000000e+00> : vector<8xf32>
    %70 = vector.multi_reduction <add>, %69, %cst_25 [1] : vector<8x256xf32> to vector<8xf32>
    %71 = vector.shape_cast %70 : vector<8xf32> to vector<8x1xf32>
    %cst_26 = arith.constant 3.906250e-03 : f32
    %72 = vector.broadcast %cst_26 : f32 to vector<8x1xf32>
    %73 = arith.mulf %71, %72 : vector<8x1xf32>
    %74 = arith.mulf %69, %69 : vector<8x256xf32>
    %cst_27 = arith.constant dense<0.000000e+00> : vector<8xf32>
    %75 = vector.multi_reduction <add>, %74, %cst_27 [1] : vector<8x256xf32> to vector<8xf32>
    %76 = vector.shape_cast %75 : vector<8xf32> to vector<8x1xf32>
    %cst_28 = arith.constant 3.906250e-03 : f32
    %77 = vector.broadcast %cst_28 : f32 to vector<8x1xf32>
    %78 = arith.mulf %76, %77 : vector<8x1xf32>
    %79 = arith.mulf %73, %73 : vector<8x1xf32>
    %80 = arith.subf %78, %79 : vector<8x1xf32>
    %81 = vector.broadcast %73 : vector<8x1xf32> to vector<8x256xf32>
    %82 = arith.subf %69, %81 : vector<8x256xf32>
    %cst_29 = arith.constant 9.99999974E-6 : f32
    %83 = vector.broadcast %cst_29 : f32 to vector<8x1xf32>
    %84 = arith.addf %80, %83 : vector<8x1xf32>
    %85 = math.rsqrt %84 : vector<8x1xf32>
    %86 = vector.broadcast %85 : vector<8x1xf32> to vector<8x256xf32>
    %87 = arith.mulf %82, %86 : vector<8x256xf32>
    %c17_i32_30 = arith.constant 17 : i32
    %88 = tpu.dynamic_rotate %87 by %c17_i32_30 dim 1 : vector<8x256xf32>, i32 -> vector<8x256xf32>
    %89 = vector.extract_strided_slice %6 {offsets = [0, 0], sizes = [1, 256], strides = [1, 1]} : vector<9x256xf32> to vector<1x256xf32>
    %90 = vector.broadcast %89 : vector<1x256xf32> to vector<8x256xf32>
    %91 = arith.mulf %88, %90 : vector<8x256xf32>
    %c16_i32_31 = arith.constant 16 : i32
    %92 = tpu.dynamic_rotate %87 by %c16_i32_31 dim 1 : vector<8x256xf32>, i32 -> vector<8x256xf32>
    %93 = vector.extract_strided_slice %6 {offsets = [1, 0], sizes = [1, 256], strides = [1, 1]} : vector<9x256xf32> to vector<1x256xf32>
    %94 = vector.broadcast %93 : vector<1x256xf32> to vector<8x256xf32>
    %95 = arith.mulf %92, %94 : vector<8x256xf32>
    %c15_i32_32 = arith.constant 15 : i32
    %96 = tpu.dynamic_rotate %87 by %c15_i32_32 dim 1 : vector<8x256xf32>, i32 -> vector<8x256xf32>
    %97 = vector.extract_strided_slice %6 {offsets = [2, 0], sizes = [1, 256], strides = [1, 1]} : vector<9x256xf32> to vector<1x256xf32>
    %98 = vector.broadcast %97 : vector<1x256xf32> to vector<8x256xf32>
    %99 = arith.mulf %96, %98 : vector<8x256xf32>
    %c1_i32_33 = arith.constant 1 : i32
    %100 = tpu.dynamic_rotate %87 by %c1_i32_33 dim 1 : vector<8x256xf32>, i32 -> vector<8x256xf32>
    %101 = vector.extract_strided_slice %6 {offsets = [3, 0], sizes = [1, 256], strides = [1, 1]} : vector<9x256xf32> to vector<1x256xf32>
    %102 = vector.broadcast %101 : vector<1x256xf32> to vector<8x256xf32>
    %103 = arith.mulf %100, %102 : vector<8x256xf32>
    %c255_i32_34 = arith.constant 255 : i32
    %104 = tpu.dynamic_rotate %87 by %c255_i32_34 dim 1 : vector<8x256xf32>, i32 -> vector<8x256xf32>
    %105 = vector.extract_strided_slice %6 {offsets = [5, 0], sizes = [1, 256], strides = [1, 1]} : vector<9x256xf32> to vector<1x256xf32>
    %106 = vector.broadcast %105 : vector<1x256xf32> to vector<8x256xf32>
    %107 = arith.mulf %104, %106 : vector<8x256xf32>
    %c241_i32_35 = arith.constant 241 : i32
    %108 = tpu.dynamic_rotate %87 by %c241_i32_35 dim 1 : vector<8x256xf32>, i32 -> vector<8x256xf32>
    %109 = vector.extract_strided_slice %6 {offsets = [6, 0], sizes = [1, 256], strides = [1, 1]} : vector<9x256xf32> to vector<1x256xf32>
    %110 = vector.broadcast %109 : vector<1x256xf32> to vector<8x256xf32>
    %111 = arith.mulf %108, %110 : vector<8x256xf32>
    %c240_i32_36 = arith.constant 240 : i32
    %112 = tpu.dynamic_rotate %87 by %c240_i32_36 dim 1 : vector<8x256xf32>, i32 -> vector<8x256xf32>
    %113 = vector.extract_strided_slice %6 {offsets = [7, 0], sizes = [1, 256], strides = [1, 1]} : vector<9x256xf32> to vector<1x256xf32>
    %114 = vector.broadcast %113 : vector<1x256xf32> to vector<8x256xf32>
    %115 = arith.mulf %112, %114 : vector<8x256xf32>
    %c239_i32_37 = arith.constant 239 : i32
    %116 = tpu.dynamic_rotate %87 by %c239_i32_37 dim 1 : vector<8x256xf32>, i32 -> vector<8x256xf32>
    %117 = vector.extract_strided_slice %6 {offsets = [8, 0], sizes = [1, 256], strides = [1, 1]} : vector<9x256xf32> to vector<1x256xf32>
    %118 = vector.broadcast %117 : vector<1x256xf32> to vector<8x256xf32>
    %119 = arith.mulf %116, %118 : vector<8x256xf32>
    %120 = tpu.concatenate %91, %95, %99, %103, %87, %107, %111, %115, %119 in 0 : vector<8x256xf32>, vector<8x256xf32>, vector<8x256xf32>, vector<8x256xf32>, vector<8x256xf32>, vector<8x256xf32>, vector<8x256xf32>, vector<8x256xf32>, vector<8x256xf32> -> vector<72x256xf32>
    %121 = arith.truncf %120 : vector<72x256xf32> to vector<72x256xbf16>
    %cst_38 = arith.constant dense<0.000000e+00> : vector<8x256xf32>
    %122 = tpu.matmul %2, %121, %cst_38 {dimension_numbers = #tpu.dot_dimension_numbers<[1], [0], [0], [1], [0, 0, 1, 1], [], []>} : vector<8x72xbf16>, vector<72x256xbf16>, vector<8x256xf32> -> vector<8x256xf32>
    %123 = vector.broadcast %3 : vector<8x1xf32> to vector<8x256xf32>
    %124 = arith.addf %122, %123 : vector<8x256xf32>
    %cst_39 = arith.constant 0.000000e+00 : f32
    %125 = vector.broadcast %cst_39 : f32 to vector<8x256xf32>
    %126 = arith.cmpf oge, %124, %125 : vector<8x256xf32>
    %cst_40 = arith.constant 2.000000e-01 : f32
    %127 = vector.broadcast %cst_40 : f32 to vector<8x256xf32>
    %128 = arith.mulf %127, %124 : vector<8x256xf32>
    %129 = arith.select %126, %124, %128 : vector<8x256xi1>, vector<8x256xf32>
    %c17_i32_41 = arith.constant 17 : i32
    %130 = tpu.dynamic_rotate %129 by %c17_i32_41 dim 1 : vector<8x256xf32>, i32 -> vector<8x256xf32>
    %131 = vector.extract_strided_slice %6 {offsets = [0, 0], sizes = [1, 256], strides = [1, 1]} : vector<9x256xf32> to vector<1x256xf32>
    %132 = vector.broadcast %131 : vector<1x256xf32> to vector<8x256xf32>
    %133 = arith.mulf %130, %132 : vector<8x256xf32>
    %c16_i32_42 = arith.constant 16 : i32
    %134 = tpu.dynamic_rotate %129 by %c16_i32_42 dim 1 : vector<8x256xf32>, i32 -> vector<8x256xf32>
    %135 = vector.extract_strided_slice %6 {offsets = [1, 0], sizes = [1, 256], strides = [1, 1]} : vector<9x256xf32> to vector<1x256xf32>
    %136 = vector.broadcast %135 : vector<1x256xf32> to vector<8x256xf32>
    %137 = arith.mulf %134, %136 : vector<8x256xf32>
    %c15_i32_43 = arith.constant 15 : i32
    %138 = tpu.dynamic_rotate %129 by %c15_i32_43 dim 1 : vector<8x256xf32>, i32 -> vector<8x256xf32>
    %139 = vector.extract_strided_slice %6 {offsets = [2, 0], sizes = [1, 256], strides = [1, 1]} : vector<9x256xf32> to vector<1x256xf32>
    %140 = vector.broadcast %139 : vector<1x256xf32> to vector<8x256xf32>
    %141 = arith.mulf %138, %140 : vector<8x256xf32>
    %c1_i32_44 = arith.constant 1 : i32
    %142 = tpu.dynamic_rotate %129 by %c1_i32_44 dim 1 : vector<8x256xf32>, i32 -> vector<8x256xf32>
    %143 = vector.extract_strided_slice %6 {offsets = [3, 0], sizes = [1, 256], strides = [1, 1]} : vector<9x256xf32> to vector<1x256xf32>
    %144 = vector.broadcast %143 : vector<1x256xf32> to vector<8x256xf32>
    %145 = arith.mulf %142, %144 : vector<8x256xf32>
    %c255_i32_45 = arith.constant 255 : i32
    %146 = tpu.dynamic_rotate %129 by %c255_i32_45 dim 1 : vector<8x256xf32>, i32 -> vector<8x256xf32>
    %147 = vector.extract_strided_slice %6 {offsets = [5, 0], sizes = [1, 256], strides = [1, 1]} : vector<9x256xf32> to vector<1x256xf32>
    %148 = vector.broadcast %147 : vector<1x256xf32> to vector<8x256xf32>
    %149 = arith.mulf %146, %148 : vector<8x256xf32>
    %c241_i32_46 = arith.constant 241 : i32
    %150 = tpu.dynamic_rotate %129 by %c241_i32_46 dim 1 : vector<8x256xf32>, i32 -> vector<8x256xf32>
    %151 = vector.extract_strided_slice %6 {offsets = [6, 0], sizes = [1, 256], strides = [1, 1]} : vector<9x256xf32> to vector<1x256xf32>
    %152 = vector.broadcast %151 : vector<1x256xf32> to vector<8x256xf32>
    %153 = arith.mulf %150, %152 : vector<8x256xf32>
    %c240_i32_47 = arith.constant 240 : i32
    %154 = tpu.dynamic_rotate %129 by %c240_i32_47 dim 1 : vector<8x256xf32>, i32 -> vector<8x256xf32>
    %155 = vector.extract_strided_slice %6 {offsets = [7, 0], sizes = [1, 256], strides = [1, 1]} : vector<9x256xf32> to vector<1x256xf32>
    %156 = vector.broadcast %155 : vector<1x256xf32> to vector<8x256xf32>
    %157 = arith.mulf %154, %156 : vector<8x256xf32>
    %c239_i32_48 = arith.constant 239 : i32
    %158 = tpu.dynamic_rotate %129 by %c239_i32_48 dim 1 : vector<8x256xf32>, i32 -> vector<8x256xf32>
    %159 = vector.extract_strided_slice %6 {offsets = [8, 0], sizes = [1, 256], strides = [1, 1]} : vector<9x256xf32> to vector<1x256xf32>
    %160 = vector.broadcast %159 : vector<1x256xf32> to vector<8x256xf32>
    %161 = arith.mulf %158, %160 : vector<8x256xf32>
    %162 = tpu.concatenate %133, %137, %141, %145, %129, %149, %153, %157, %161 in 0 : vector<8x256xf32>, vector<8x256xf32>, vector<8x256xf32>, vector<8x256xf32>, vector<8x256xf32>, vector<8x256xf32>, vector<8x256xf32>, vector<8x256xf32>, vector<8x256xf32> -> vector<72x256xf32>
    %163 = arith.truncf %162 : vector<72x256xf32> to vector<72x256xbf16>
    %cst_49 = arith.constant dense<0.000000e+00> : vector<8x256xf32>
    %164 = tpu.matmul %4, %163, %cst_49 {dimension_numbers = #tpu.dot_dimension_numbers<[1], [0], [0], [1], [0, 0, 1, 1], [], []>} : vector<8x72xbf16>, vector<72x256xbf16>, vector<8x256xf32> -> vector<8x256xf32>
    %165 = vector.broadcast %5 : vector<8x1xf32> to vector<8x256xf32>
    %166 = arith.addf %164, %165 : vector<8x256xf32>
    %c0_50 = arith.constant 0 : index
    %c0_51 = arith.constant 0 : index
    %c0_52 = arith.constant 0 : index
    %167 = vector.load %arg10[%c0_50, %c0_51, %c0_52] : memref<1x8x256xf32, #tpu.memory_space<vmem>>, vector<1x8x256xf32>
    %168 = vector.shape_cast %167 : vector<1x8x256xf32> to vector<8x256xf32>
    %169 = vector.shape_cast %166 : vector<8x256xf32> to vector<1x8x256xf32>
    tpu.vector_store %arg10[%c0_50, %c0_51, %c0_52], %169 {strides = array<i32>} : memref<1x8x256xf32, #tpu.memory_space<vmem>>, vector<1x8x256xf32>,
    %c255_i32_53 = arith.constant 255 : i32
    %170 = tpu.dynamic_rotate %166 by %c255_i32_53 dim 1 : vector<8x256xf32>, i32 -> vector<8x256xf32>
    %171 = arith.addf %166, %170 : vector<8x256xf32>
    %c240_i32_54 = arith.constant 240 : i32
    %172 = tpu.dynamic_rotate %171 by %c240_i32_54 dim 1 : vector<8x256xf32>, i32 -> vector<8x256xf32>
    %173 = arith.addf %171, %172 : vector<8x256xf32>
    %cst_55 = arith.constant 2.500000e-01 : f32
    %174 = vector.broadcast %cst_55 : f32 to vector<8x256xf32>
    %175 = arith.mulf %173, %174 : vector<8x256xf32>
    %c34_i32 = arith.constant 34 : i32
    %176 = tpu.dynamic_rotate %175 by %c34_i32 dim 1 : vector<8x256xf32>, i32 -> vector<8x256xf32>
    %177 = vector.extract_strided_slice %7 {offsets = [0, 0], sizes = [1, 256], strides = [1, 1]} : vector<9x256xf32> to vector<1x256xf32>
    %178 = vector.broadcast %177 : vector<1x256xf32> to vector<8x256xf32>
    %179 = arith.mulf %176, %178 : vector<8x256xf32>
    %c32_i32 = arith.constant 32 : i32
    %180 = tpu.dynamic_rotate %175 by %c32_i32 dim 1 : vector<8x256xf32>, i32 -> vector<8x256xf32>
    %181 = vector.extract_strided_slice %7 {offsets = [1, 0], sizes = [1, 256], strides = [1, 1]} : vector<9x256xf32> to vector<1x256xf32>
    %182 = vector.broadcast %181 : vector<1x256xf32> to vector<8x256xf32>
    %183 = arith.mulf %180, %182 : vector<8x256xf32>
    %c30_i32 = arith.constant 30 : i32
    %184 = tpu.dynamic_rotate %175 by %c30_i32 dim 1 : vector<8x256xf32>, i32 -> vector<8x256xf32>
    %185 = vector.extract_strided_slice %7 {offsets = [2, 0], sizes = [1, 256], strides = [1, 1]} : vector<9x256xf32> to vector<1x256xf32>
    %186 = vector.broadcast %185 : vector<1x256xf32> to vector<8x256xf32>
    %187 = arith.mulf %184, %186 : vector<8x256xf32>
    %c2_i32 = arith.constant 2 : i32
    %188 = tpu.dynamic_rotate %175 by %c2_i32 dim 1 : vector<8x256xf32>, i32 -> vector<8x256xf32>
    %189 = vector.extract_strided_slice %7 {offsets = [3, 0], sizes = [1, 256], strides = [1, 1]} : vector<9x256xf32> to vector<1x256xf32>
    %190 = vector.broadcast %189 : vector<1x256xf32> to vector<8x256xf32>
    %191 = arith.mulf %188, %190 : vector<8x256xf32>
    %c254_i32 = arith.constant 254 : i32
    %192 = tpu.dynamic_rotate %175 by %c254_i32 dim 1 : vector<8x256xf32>, i32 -> vector<8x256xf32>
    %193 = vector.extract_strided_slice %7 {offsets = [5, 0], sizes = [1, 256], strides = [1, 1]} : vector<9x256xf32> to vector<1x256xf32>
    %194 = vector.broadcast %193 : vector<1x256xf32> to vector<8x256xf32>
    %195 = arith.mulf %192, %194 : vector<8x256xf32>
    %c226_i32 = arith.constant 226 : i32
    %196 = tpu.dynamic_rotate %175 by %c226_i32 dim 1 : vector<8x256xf32>, i32 -> vector<8x256xf32>
    %197 = vector.extract_strided_slice %7 {offsets = [6, 0], sizes = [1, 256], strides = [1, 1]} : vector<9x256xf32> to vector<1x256xf32>
    %198 = vector.broadcast %197 : vector<1x256xf32> to vector<8x256xf32>
    %199 = arith.mulf %196, %198 : vector<8x256xf32>
    %c224_i32 = arith.constant 224 : i32
    %200 = tpu.dynamic_rotate %175 by %c224_i32 dim 1 : vector<8x256xf32>, i32 -> vector<8x256xf32>
    %201 = vector.extract_strided_slice %7 {offsets = [7, 0], sizes = [1, 256], strides = [1, 1]} : vector<9x256xf32> to vector<1x256xf32>
    %202 = vector.broadcast %201 : vector<1x256xf32> to vector<8x256xf32>
    %203 = arith.mulf %200, %202 : vector<8x256xf32>
    %c222_i32 = arith.constant 222 : i32
    %204 = tpu.dynamic_rotate %175 by %c222_i32 dim 1 : vector<8x256xf32>, i32 -> vector<8x256xf32>
    %205 = vector.extract_strided_slice %7 {offsets = [8, 0], sizes = [1, 256], strides = [1, 1]} : vector<9x256xf32> to vector<1x256xf32>
    %206 = vector.broadcast %205 : vector<1x256xf32> to vector<8x256xf32>
    %207 = arith.mulf %204, %206 : vector<8x256xf32>
    %208 = tpu.concatenate %179, %183, %187, %191, %175, %195, %199, %203, %207 in 0 : vector<8x256xf32>, vector<8x256xf32>, vector<8x256xf32>, vector<8x256xf32>, vector<8x256xf32>, vector<8x256xf32>, vector<8x256xf32>, vector<8x256xf32>, vector<8x256xf32> -> vector<72x256xf32>
    %209 = arith.truncf %208 : vector<72x256xf32> to vector<72x256xbf16>
    %cst_56 = arith.constant dense<0.000000e+00> : vector<8x256xf32>
    %210 = tpu.matmul %4, %209, %cst_56 {dimension_numbers = #tpu.dot_dimension_numbers<[1], [0], [0], [1], [0, 0, 1, 1], [], []>} : vector<8x72xbf16>, vector<72x256xbf16>, vector<8x256xf32> -> vector<8x256xf32>
    %211 = vector.broadcast %5 : vector<8x1xf32> to vector<8x256xf32>
    %212 = arith.addf %210, %211 : vector<8x256xf32>
    %c0_57 = arith.constant 0 : index
    %c0_58 = arith.constant 0 : index
    %c0_59 = arith.constant 0 : index
    %213 = vector.load %arg11[%c0_57, %c0_58, %c0_59] : memref<1x8x256xf32, #tpu.memory_space<vmem>>, vector<1x8x256xf32>
    %214 = vector.shape_cast %213 : vector<1x8x256xf32> to vector<8x256xf32>
    %215 = vector.shape_cast %212 : vector<8x256xf32> to vector<1x8x256xf32>
    tpu.vector_store %arg11[%c0_57, %c0_58, %c0_59], %215 {strides = array<i32>} : memref<1x8x256xf32, #tpu.memory_space<vmem>>, vector<1x8x256xf32>,
    return
  }
  func.func @transform_0(%arg0: i32) -> (i32, i32, i32) {
    %c0_i32 = arith.constant 0 : i32
    %c0_i32_0 = arith.constant 0 : i32
    %c0_i32_1 = arith.constant 0 : i32
    return %arg0, %c0_i32, %c0_i32_0 : i32, i32, i32
  }
  func.func @transform_1(%arg0: i32) -> (i32, i32) {
    %c0_i32 = arith.constant 0 : i32
    %c0_i32_0 = arith.constant 0 : i32
    %c0_i32_1 = arith.constant 0 : i32
    return %c0_i32, %c0_i32_0 : i32, i32
  }
  func.func @transform_2(%arg0: i32) -> (i32, i32) {
    %c0_i32 = arith.constant 0 : i32
    %c0_i32_0 = arith.constant 0 : i32
    %c0_i32_1 = arith.constant 0 : i32
    return %c0_i32, %c0_i32_0 : i32, i32
  }
  func.func @transform_3(%arg0: i32) -> (i32, i32) {
    %c0_i32 = arith.constant 0 : i32
    %c0_i32_0 = arith.constant 0 : i32
    %c0_i32_1 = arith.constant 0 : i32
    return %c0_i32, %c0_i32_0 : i32, i32
  }
  func.func @transform_4(%arg0: i32) -> (i32, i32) {
    %c0_i32 = arith.constant 0 : i32
    %c0_i32_0 = arith.constant 0 : i32
    %c0_i32_1 = arith.constant 0 : i32
    return %c0_i32, %c0_i32_0 : i32, i32
  }
  func.func @transform_5(%arg0: i32) -> (i32, i32) {
    %c0_i32 = arith.constant 0 : i32
    %c0_i32_0 = arith.constant 0 : i32
    %c0_i32_1 = arith.constant 0 : i32
    return %c0_i32, %c0_i32_0 : i32, i32
  }
  func.func @transform_6(%arg0: i32) -> (i32, i32) {
    %c0_i32 = arith.constant 0 : i32
    %c0_i32_0 = arith.constant 0 : i32
    %c0_i32_1 = arith.constant 0 : i32
    return %c0_i32, %c0_i32_0 : i32, i32
  }
  func.func @transform_7(%arg0: i32) -> (i32, i32) {
    %c0_i32 = arith.constant 0 : i32
    %c0_i32_0 = arith.constant 0 : i32
    %c0_i32_1 = arith.constant 0 : i32
    return %c0_i32, %c0_i32_0 : i32, i32
  }
  func.func @transform_8(%arg0: i32) -> (i32, i32) {
    %c0_i32 = arith.constant 0 : i32
    %c0_i32_0 = arith.constant 0 : i32
    %c0_i32_1 = arith.constant 0 : i32
    return %c0_i32, %c0_i32_0 : i32, i32
  }
  func.func @transform_9(%arg0: i32) -> (i32, i32, i32) {
    %c0_i32 = arith.constant 0 : i32
    %c0_i32_0 = arith.constant 0 : i32
    %c0_i32_1 = arith.constant 0 : i32
    return %arg0, %c0_i32, %c0_i32_0 : i32, i32, i32
  }
  func.func @transform_10(%arg0: i32) -> (i32, i32, i32) {
    %c0_i32 = arith.constant 0 : i32
    %c0_i32_0 = arith.constant 0 : i32
    %c0_i32_1 = arith.constant 0 : i32
    return %arg0, %c0_i32, %c0_i32_0 : i32, i32, i32
  }
}

</mosaic_0001>

<llo_original>
// kernel: unet_enc_block_forward.1
$region0: #{unet_enc_block_forward.1}
  #allocation0 [shape = 'u32[]', space=smem, size = 0x4, offset = 0x4, fixed_abs, tag = 'smem constant byte address 0x4 - core index']
  #allocation1 [shape = 'u32[72,128]{1,0:T(1,128)}', space=vmem, size = 0x9000, scoped, tag = 'internal scratch']
  %s0 = inlined_call_operand.vmem [shape: f32[2,8,256], index: 0, kind: input, shape index: {}]
  %s1 = inlined_call_operand.vmem [shape: bf16[8,72], index: 1, kind: input, shape index: {}]
  %s2 = inlined_call_operand.vmem [shape: f32[8,1], index: 2, kind: input, shape index: {}]
  %s3 = inlined_call_operand.vmem [shape: bf16[8,72], index: 3, kind: input, shape index: {}]
  %s4 = inlined_call_operand.vmem [shape: f32[8,1], index: 4, kind: input, shape index: {}]
  %s5 = inlined_call_operand.vmem [shape: bf16[8,72], index: 5, kind: input, shape index: {}]
  %s6 = inlined_call_operand.vmem [shape: f32[8,1], index: 6, kind: input, shape index: {}]
  %s7 = inlined_call_operand.vmem [shape: f32[9,256], index: 7, kind: input, shape index: {}]
  %s8 = inlined_call_operand.vmem [shape: f32[9,256], index: 8, kind: input, shape index: {}]
  %s9 = inlined_call_operand.vmem [shape: f32[2,8,256], index: 9, kind: output, shape index: {0}]
  %s10 = inlined_call_operand.vmem [shape: f32[2,8,256], index: 10, kind: output, shape index: {1}]
  %11 = xla_tuple %s9, %s10
  %s12 = sld [smem:[#allocation0]]
  $region77: #{unet_enc_block_forward.1} parent=0
    _
  %s14 = ssub.s32 1, %s12
  %s15 = scalar_select 0, %s14, %s12
  loop: start=0, step=1, limit=4
  $region2: #{unet_enc_block_forward.1} parent=0 // loop_pre_header
    _
  $region3: #{unet_enc_block_forward.1} parent=0 // loop_header
    %s17 = sphi 0, %s21
    %p18 = scmp.ge.s32.totalorder %s17, 4
    %s27 = sphi 0, %s29
    %s30 = sphi 0, %s27
    %s31 = sphi 0, %s30
    %s47 = sphi 0, %s31
    %s51 = sphi 0, %s51
    %s53 = sphi 0, %s51
    %s54 = sphi 0, %s53
    %s68 = sphi 0, %s54
    %s72 = sphi 0, %s72
    %s74 = sphi 0, %s72
    %s75 = sphi 0, %s74
    %s89 = sphi 0, %s75
    %s93 = sphi 0, %s93
    %s95 = sphi 0, %s93
    %s96 = sphi 0, %s95
    %s110 = sphi 0, %s96
    %s114 = sphi 0, %s114
    %s116 = sphi 0, %s114
    %s117 = sphi 0, %s116
    %s131 = sphi 0, %s117
    %s135 = sphi 0, %s135
    %s137 = sphi 0, %s135
    %s138 = sphi 0, %s137
    %s152 = sphi 0, %s138
    %s156 = sphi 0, %s156
    %s158 = sphi 0, %s156
    %s159 = sphi 0, %s158
    %s173 = sphi 0, %s159
    %s177 = sphi 0, %s177
    %s179 = sphi 0, %s177
    %s180 = sphi 0, %s179
    %s194 = sphi 0, %s180
    %s198 = sphi 0, %s198
    %s200 = sphi 0, %s198
    %s201 = sphi 0, %s200
    %s215 = sphi 0, %s201
    %s221 = sphi 0, %s223
    %s224 = sphi 0, %s221
    %s225 = sphi 0, %s224
    %s241 = sphi 0, %s225
    %s247 = sphi 0, %s249
    %s250 = sphi 0, %s247
    %s251 = sphi 0, %s250
    %s267 = sphi 0, %s251
  $region4: #{unet_enc_block_forward.1} parent=0 // loop_header_branch
    %20 = sbr.rel (%p18) target = $region8
  $region5: #{unet_enc_block_forward.1} parent=0 // loop_body
    %s22 = ssub.s32 %s17, 1
    %s23 = ssub.s32 %s17, 2
    %s24 = sadd.s32 %s17, 1
    %s25 = ssub.s32 %s17, %s24
    %p26 = scmp.eq.s32.totalorder %s25, 0
    %s28 = sadd.s32 %s27, 1
    %s29 = scalar_select %p26, %s27, %s28
    %p32 = pneg %p26
    %p33 = scmp.eq.s32.totalorder %s17, 1
    %p34 = por %p32, %p33
    %p35 = scmp.ne.s32.totalorder %s27, %s30
    %p36 = scmp.eq.s32.totalorder %s17, 0
    %p37 = por %p35, %p36
    %p38 = scmp.ne.s32.totalorder %s27, %s30
    %p39 = scmp.eq.s32.totalorder %s22, 1
    %p40 = por %p38, %p39
    %p41 = scmp.ne.s32.totalorder %s30, %s31
    %p42 = scmp.eq.s32.totalorder %s22, 0
    %p43 = por %p41, %p42
    %p44 = scmp.ne.s32.totalorder %s30, %s31
    %p45 = scmp.eq.s32.totalorder %s23, 1
    %p46 = por %p44, %p45
    %p48 = scmp.ne.s32.totalorder %s31, %s47
    %p49 = scmp.eq.s32.totalorder %s23, 0
    %p50 = por %p48, %p49
    %s52 = sadd.s32 %s51, 1
    %p55 = scmp.eq.s32.totalorder %s17, 1
    %p56 = scmp.ne.s32.totalorder %s51, %s53
    %p57 = scmp.eq.s32.totalorder %s17, 0
    %p58 = por %p56, %p57
    %p59 = scmp.ne.s32.totalorder %s51, %s53
    %p60 = scmp.eq.s32.totalorder %s22, 1
    %p61 = por %p59, %p60
    %p62 = scmp.ne.s32.totalorder %s53, %s54
    %p63 = scmp.eq.s32.totalorder %s22, 0
    %p64 = por %p62, %p63
    %p65 = scmp.ne.s32.totalorder %s53, %s54
    %p66 = scmp.eq.s32.totalorder %s23, 1
    %p67 = por %p65, %p66
    %p69 = scmp.ne.s32.totalorder %s54, %s68
    %p70 = scmp.eq.s32.totalorder %s23, 0
    %p71 = por %p69, %p70
    %s73 = sadd.s32 %s72, 1
    %p76 = scmp.eq.s32.totalorder %s17, 1
    %p77 = scmp.ne.s32.totalorder %s72, %s74
    %p78 = scmp.eq.s32.totalorder %s17, 0
    %p79 = por %p77, %p78
    %p80 = scmp.ne.s32.totalorder %s72, %s74
    %p81 = scmp.eq.s32.totalorder %s22, 1
    %p82 = por %p80, %p81
    %p83 = scmp.ne.s32.totalorder %s74, %s75
    %p84 = scmp.eq.s32.totalorder %s22, 0
    %p85 = por %p83, %p84
    %p86 = scmp.ne.s32.totalorder %s74, %s75
    %p87 = scmp.eq.s32.totalorder %s23, 1
    %p88 = por %p86, %p87
    %p90 = scmp.ne.s32.totalorder %s75, %s89
    %p91 = scmp.eq.s32.totalorder %s23, 0
    %p92 = por %p90, %p91
    %s94 = sadd.s32 %s93, 1
    %p97 = scmp.eq.s32.totalorder %s17, 1
    %p98 = scmp.ne.s32.totalorder %s93, %s95
    %p99 = scmp.eq.s32.totalorder %s17, 0
    %p100 = por %p98, %p99
    %p101 = scmp.ne.s32.totalorder %s93, %s95
    %p102 = scmp.eq.s32.totalorder %s22, 1
    %p103 = por %p101, %p102
    %p104 = scmp.ne.s32.totalorder %s95, %s96
    %p105 = scmp.eq.s32.totalorder %s22, 0
    %p106 = por %p104, %p105
    %p107 = scmp.ne.s32.totalorder %s95, %s96
    %p108 = scmp.eq.s32.totalorder %s23, 1
    %p109 = por %p107, %p108
    %p111 = scmp.ne.s32.totalorder %s96, %s110
    %p112 = scmp.eq.s32.totalorder %s23, 0
    %p113 = por %p111, %p112
    %s115 = sadd.s32 %s114, 1
    %p118 = scmp.eq.s32.totalorder %s17, 1
    %p119 = scmp.ne.s32.totalorder %s114, %s116
    %p120 = scmp.eq.s32.totalorder %s17, 0
    %p121 = por %p119, %p120
    %p122 = scmp.ne.s32.totalorder %s114, %s116
    %p123 = scmp.eq.s32.totalorder %s22, 1
    %p124 = por %p122, %p123
    %p125 = scmp.ne.s32.totalorder %s116, %s117
    %p126 = scmp.eq.s32.totalorder %s22, 0
    %p127 = por %p125, %p126
    %p128 = scmp.ne.s32.totalorder %s116, %s117
    %p129 = scmp.eq.s32.totalorder %s23, 1
    %p130 = por %p128, %p129
    %p132 = scmp.ne.s32.totalorder %s117, %s131
    %p133 = scmp.eq.s32.totalorder %s23, 0
    %p134 = por %p132, %p133
    %s136 = sadd.s32 %s135, 1
    %p139 = scmp.eq.s32.totalorder %s17, 1
    %p140 = scmp.ne.s32.totalorder %s135, %s137
    %p141 = scmp.eq.s32.totalorder %s17, 0
    %p142 = por %p140, %p141
    %p143 = scmp.ne.s32.totalorder %s135, %s137
    %p144 = scmp.eq.s32.totalorder %s22, 1
    %p145 = por %p143, %p144
    %p146 = scmp.ne.s32.totalorder %s137, %s138
    %p147 = scmp.eq.s32.totalorder %s22, 0
    %p148 = por %p146, %p147
    %p149 = scmp.ne.s32.totalorder %s137, %s138
    %p150 = scmp.eq.s32.totalorder %s23, 1
    %p151 = por %p149, %p150
    %p153 = scmp.ne.s32.totalorder %s138, %s152
    %p154 = scmp.eq.s32.totalorder %s23, 0
    %p155 = por %p153, %p154
    %s157 = sadd.s32 %s156, 1
    %p160 = scmp.eq.s32.totalorder %s17, 1
    %p161 = scmp.ne.s32.totalorder %s156, %s158
    %p162 = scmp.eq.s32.totalorder %s17, 0
    %p163 = por %p161, %p162
    %p164 = scmp.ne.s32.totalorder %s156, %s158
    %p165 = scmp.eq.s32.totalorder %s22, 1
    %p166 = por %p164, %p165
    %p167 = scmp.ne.s32.totalorder %s158, %s159
    %p168 = scmp.eq.s32.totalorder %s22, 0
    %p169 = por %p167, %p168
    %p170 = scmp.ne.s32.totalorder %s158, %s159
    %p171 = scmp.eq.s32.totalorder %s23, 1
    %p172 = por %p170, %p171
    %p174 = scmp.ne.s32.totalorder %s159, %s173
    %p175 = scmp.eq.s32.totalorder %s23, 0
    %p176 = por %p174, %p175
    %s178 = sadd.s32 %s177, 1
    %p181 = scmp.eq.s32.totalorder %s17, 1
    %p182 = scmp.ne.s32.totalorder %s177, %s179
    %p183 = scmp.eq.s32.totalorder %s17, 0
    %p184 = por %p182, %p183
    %p185 = scmp.ne.s32.totalorder %s177, %s179
    %p186 = scmp.eq.s32.totalorder %s22, 1
    %p187 = por %p185, %p186
    %p188 = scmp.ne.s32.totalorder %s179, %s180
    %p189 = scmp.eq.s32.totalorder %s22, 0
    %p190 = por %p188, %p189
    %p191 = scmp.ne.s32.totalorder %s179, %s180
    %p192 = scmp.eq.s32.totalorder %s23, 1
    %p193 = por %p191, %p192
    %p195 = scmp.ne.s32.totalorder %s180, %s194
    %p196 = scmp.eq.s32.totalorder %s23, 0
    %p197 = por %p195, %p196
    %s199 = sadd.s32 %s198, 1
    %p202 = scmp.eq.s32.totalorder %s17, 1
    %p203 = scmp.ne.s32.totalorder %s198, %s200
    %p204 = scmp.eq.s32.totalorder %s17, 0
    %p205 = por %p203, %p204
    %p206 = scmp.ne.s32.totalorder %s198, %s200
    %p207 = scmp.eq.s32.totalorder %s22, 1
    %p208 = por %p206, %p207
    %p209 = scmp.ne.s32.totalorder %s200, %s201
    %p210 = scmp.eq.s32.totalorder %s22, 0
    %p211 = por %p209, %p210
    %p212 = scmp.ne.s32.totalorder %s200, %s201
    %p213 = scmp.eq.s32.totalorder %s23, 1
    %p214 = por %p212, %p213
    %p216 = scmp.ne.s32.totalorder %s201, %s215
    %p217 = scmp.eq.s32.totalorder %s23, 0
    %p218 = por %p216, %p217
    %s219 = ssub.s32 %s17, %s24
    %p220 = scmp.eq.s32.totalorder %s219, 0
    %s222 = sadd.s32 %s221, 1
    %s223 = scalar_select %p220, %s221, %s222
    %p226 = pneg %p220
    %p227 = scmp.eq.s32.totalorder %s17, 1
    %p228 = por %p226, %p227
    %p229 = scmp.ne.s32.totalorder %s221, %s224
    %p230 = scmp.eq.s32.totalorder %s17, 0
    %p231 = por %p229, %p230
    %p232 = scmp.ne.s32.totalorder %s221, %s224
    %p233 = scmp.eq.s32.totalorder %s22, 1
    %p234 = por %p232, %p233
    %p235 = scmp.ne.s32.totalorder %s224, %s225
    %p236 = scmp.eq.s32.totalorder %s22, 0
    %p237 = por %p235, %p236
    %p238 = scmp.ne.s32.totalorder %s224, %s225
    %p239 = scmp.eq.s32.totalorder %s23, 1
    %p240 = por %p238, %p239
    %p242 = scmp.ne.s32.totalorder %s225, %s241
    %p243 = scmp.eq.s32.totalorder %s23, 0
    %p244 = por %p242, %p243
    %s245 = ssub.s32 %s17, %s24
    %p246 = scmp.eq.s32.totalorder %s245, 0
    %s248 = sadd.s32 %s247, 1
    %s249 = scalar_select %p246, %s247, %s248
    %p252 = pneg %p246
    %p253 = scmp.eq.s32.totalorder %s17, 1
    %p254 = por %p252, %p253
    %p255 = scmp.ne.s32.totalorder %s247, %s250
    %p256 = scmp.eq.s32.totalorder %s17, 0
    %p257 = por %p255, %p256
    %p258 = scmp.ne.s32.totalorder %s247, %s250
    %p259 = scmp.eq.s32.totalorder %s22, 1
    %p260 = por %p258, %p259
    %p261 = scmp.ne.s32.totalorder %s250, %s251
    %p262 = scmp.eq.s32.totalorder %s22, 0
    %p263 = por %p261, %p262
    %p264 = scmp.ne.s32.totalorder %s250, %s251
    %p265 = scmp.eq.s32.totalorder %s23, 1
    %p266 = por %p264, %p265
    %p268 = scmp.ne.s32.totalorder %s251, %s267
    %p269 = scmp.eq.s32.totalorder %s23, 0
    %p270 = por %p268, %p269
    %p271 = scmp.le.s32.totalorder 1, %s17
    %p272 = scmp.lt.s32.totalorder %s17, 3
    %p273 = pnand %p271, %p272
    %p274 = pneg %p273
    // Predicated region
    $region9: #{unet_enc_block_forward.1} parent=5 // pred_check
      _
    $region10: #{unet_enc_block_forward.1} parent=5 // pred_check_branch
      %276 = sbr.rel (%p273) target = $region12
    $region11: #{unet_enc_block_forward.1} parent=5 // pred_region
      %s277 = ssub.s32 %s17, 1
      // Predicated region
      $region13: #{unet_enc_block_forward.1} parent=11 // pred_check
        %p278 = pneg %p64
      $region14: #{unet_enc_block_forward.1} parent=11 // pred_check_branch
        %280 = sbr.rel (%p278) target = $region16
      $region15: #{unet_enc_block_forward.1} parent=11 // pred_region
        _
      $region16: #{unet_enc_block_forward.1} parent=11 // pred_fallthru
        _
      // Predicated region
      $region17: #{unet_enc_block_forward.1} parent=11 // pred_check
        %p281 = pneg %p85
      $region18: #{unet_enc_block_forward.1} parent=11 // pred_check_branch
        %283 = sbr.rel (%p281) target = $region20
      $region19: #{unet_enc_block_forward.1} parent=11 // pred_region
        _
      $region20: #{unet_enc_block_forward.1} parent=11 // pred_fallthru
        _
      // Predicated region
      $region21: #{unet_enc_block_forward.1} parent=11 // pred_check
        %p284 = pneg %p106
      $region22: #{unet_enc_block_forward.1} parent=11 // pred_check_branch
        %286 = sbr.rel (%p284) target = $region24
      $region23: #{unet_enc_block_forward.1} parent=11 // pred_region
        _
      $region24: #{unet_enc_block_forward.1} parent=11 // pred_fallthru
        _
      // Predicated region
      $region25: #{unet_enc_block_forward.1} parent=11 // pred_check
        %p287 = pneg %p127
      $region26: #{unet_enc_block_forward.1} parent=11 // pred_check_branch
        %289 = sbr.rel (%p287) target = $region28
      $region27: #{unet_enc_block_forward.1} parent=11 // pred_region
        _
      $region28: #{unet_enc_block_forward.1} parent=11 // pred_fallthru
        _
      // Predicated region
      $region29: #{unet_enc_block_forward.1} parent=11 // pred_check
        %p290 = pneg %p148
      $region30: #{unet_enc_block_forward.1} parent=11 // pred_check_branch
        %292 = sbr.rel (%p290) target = $region32
      $region31: #{unet_enc_block_forward.1} parent=11 // pred_region
        _
      $region32: #{unet_enc_block_forward.1} parent=11 // pred_fallthru
        _
      // Predicated region
      $region33: #{unet_enc_block_forward.1} parent=11 // pred_check
        %p293 = pneg %p169
      $region34: #{unet_enc_block_forward.1} parent=11 // pred_check_branch
        %295 = sbr.rel (%p293) target = $region36
      $region35: #{unet_enc_block_forward.1} parent=11 // pred_region
        _
      $region36: #{unet_enc_block_forward.1} parent=11 // pred_fallthru
        _
      // Predicated region
      $region37: #{unet_enc_block_forward.1} parent=11 // pred_check
        %p296 = pneg %p190
      $region38: #{unet_enc_block_forward.1} parent=11 // pred_check_branch
        %298 = sbr.rel (%p296) target = $region40
      $region39: #{unet_enc_block_forward.1} parent=11 // pred_region
        _
      $region40: #{unet_enc_block_forward.1} parent=11 // pred_fallthru
        _
      // Predicated region
      $region41: #{unet_enc_block_forward.1} parent=11 // pred_check
        %p299 = pneg %p211
      $region42: #{unet_enc_block_forward.1} parent=11 // pred_check_branch
        %301 = sbr.rel (%p299) target = $region44
      $region43: #{unet_enc_block_forward.1} parent=11 // pred_region
        _
      $region44: #{unet_enc_block_forward.1} parent=11 // pred_fallthru
        _
    $region12: #{unet_enc_block_forward.1} parent=5 // pred_fallthru
      _
    %p302 = scmp.lt.s32.totalorder %s17, 2
    // Predicated region
    $region45: #{unet_enc_block_forward.1} parent=5 // pred_check
      %p303 = pneg %p302
    $region46: #{unet_enc_block_forward.1} parent=5 // pred_check_branch
      %305 = sbr.rel (%p303) target = $region48
    $region47: #{unet_enc_block_forward.1} parent=5 // pred_region
      // Predicated region
      $region49: #{unet_enc_block_forward.1} parent=47 // pred_check
        %p306 = pneg %p37
      $region50: #{unet_enc_block_forward.1} parent=47 // pred_check_branch
        %308 = sbr.rel (%p306) target = $region52
      $region51: #{unet_enc_block_forward.1} parent=47 // pred_region
        %p309 = scmp.lt.s32.totalorder %s17, 1
        %s310 = scalar_select %p309, %s17, 1
        %s311 = smul.addr %s310, 2
        %s312 = smul.addr %s311, 8
        %s313 = scalar_lea.vmem %s0, %s312
      $region52: #{unet_enc_block_forward.1} parent=47 // pred_fallthru
        _
    $region48: #{unet_enc_block_forward.1} parent=5 // pred_fallthru
      _
    %p314 = scmp.le.s32.totalorder 1, %s17
    %p315 = scmp.lt.s32.totalorder %s17, 3
    %p316 = pnand %p314, %p315
    %p317 = pneg %p316
    // Predicated region
    $region53: #{unet_enc_block_forward.1} parent=5 // pred_check
      _
    $region54: #{unet_enc_block_forward.1} parent=5 // pred_check_branch
      %319 = sbr.rel (%p316) target = $region56
    $region55: #{unet_enc_block_forward.1} parent=5 // pred_region
      %s320 = ssub.s32 %s17, 1
      %p321 = scmp.lt.s32.totalorder %s22, 1
      %s322 = scalar_select %p321, %s22, 1
      %s323 = smul.addr %s322, 2
      %s324 = smul.addr %s323, 8
      %s325 = scalar_lea.vmem %s0, %s324
      %p326 = pneg %p43
      %p327 = pneg %p40
      %p328 = pneg %p64
      %p329 = pneg %p61
      %p330 = pneg %p85
      %p331 = pneg %p82
      %p332 = pneg %p106
      %p333 = pneg %p103
      %p334 = pneg %p127
      %p335 = pneg %p124
      %p336 = pneg %p148
      %p337 = pneg %p145
      %p338 = pneg %p169
      %p339 = pneg %p166
      %p340 = pneg %p190
      %p341 = pneg %p187
      %p342 = pneg %p211
      %p343 = pneg %p208
      %p344 = pneg %p237
      %p345 = pneg %p234
      %p346 = scmp.lt.s32.totalorder %s22, 1
      %s347 = scalar_select %p346, %s22, 1
      %s348 = smul.addr %s347, 2
      %s349 = smul.addr %s348, 8
      %s350 = scalar_lea.vmem %s9, %s349
      %p351 = pneg %p263
      %p352 = pneg %p260
      %p353 = scmp.lt.s32.totalorder %s22, 1
      %s354 = scalar_select %p353, %s22, 1
      %s355 = smul.addr %s354, 2
      %s356 = smul.addr %s355, 8
      %s357 = scalar_lea.vmem %s10, %s356
      %p358 = scmp.lt.s32.totalorder %s22, 1
      %s359 = scalar_select %p358, %s22, 1
      %s360 = smul.addr %s359, 2
      %s361 = smul.addr %s360, 8
      %s362 = scalar_lea.vmem %s0, %s361
      %p363 = scmp.lt.s32.totalorder %s22, 1
      %s364 = scalar_select %p363, %s22, 1
      %s365 = smul.addr %s364, 2
      %s366 = smul.addr %s365, 8
      %s367 = scalar_lea.vmem %s9, %s366
      %p368 = scmp.lt.s32.totalorder %s22, 1
      %s369 = scalar_select %p368, %s22, 1
      %s370 = smul.addr %s369, 2
      %s371 = smul.addr %s370, 8
      %s372 = scalar_lea.vmem %s10, %s371
      %v374 = vld [vmem:[%s1] sm:$0xf]
      %v375 = vld [vmem:[%s2] sm:$0xff]
      %v376 = vld [vmem:[%s3] sm:$0xf]
      %v377 = vld [vmem:[%s4] sm:$0xff]
      %v378 = vld [vmem:[%s5] sm:$0xf]
      %v379 = vld [vmem:[%s6] sm:$0xff]
      %v380 = vld [vmem:[%s7] sm:$0xff]
      %v381 = vld [vmem:[%s7 + $0x8] sm:$0xff]
      %v382 = vld [vmem:[%s7 + $0x10] sm:$0x1]
      %v383 = vld [vmem:[%s7 + $0x18] sm:$0x1]
      %v384 = vld [vmem:[%s8] sm:$0xff]
      %v385 = vld [vmem:[%s8 + $0x8] sm:$0xff]
      %v386 = vld [vmem:[%s8 + $0x10] sm:$0x1]
      %v387 = vld [vmem:[%s8 + $0x18] sm:$0x1]
      %v388 = vld [vmem:[%s362] sm:$0xff]
      %v389 = vld [vmem:[%s362 + $0x8] sm:$0xff]
      %v390 = vadd.f32 %v388, %v389
      %391 = vadd.xlane.f32.xlu0 %v390
      %v392 = vpop.xlane.xlu0 %391
      %v393 = vmul.f32 %v392, 0.00390625
      %v394 = vmul.f32 %v388, %v388
      %v395 = vmul.f32 %v389, %v389
      %v396 = vadd.f32 %v394, %v395
      %397 = vadd.xlane.f32.xlu0 %v396
      %v398 = vpop.xlane.xlu0 %397
      %v399 = vmul.f32 %v398, 0.00390625
      %v400 = vmul.f32 %v393, %v393
      %v401 = vsub.f32 %v399, %v400
      %v402 = vsub.f32 %v388, %v393
      %v403 = vsub.f32 %v389, %v393
      %v404 = vadd.f32 %v401, 1e-05
      %v405 = vrsqrt.pop %v404
      %v406 = vmul.f32 %v405, %v404
      %v407 = vmul.f32 %v406, %v405
      %v408 = vmul.f32 0.5, %v407
      %v409 = vsub.f32 1.5, %v408
      %v410 = vmul.f32 %v405, %v409
      %vm411 = vweird.f32 %v404
      %vm412 = vweird.f32 %v405
      %vm413 = vmor %vm411, %vm412
      %v414 = vsel %vm413, %v405, %v410
      %v415 = vmul.f32 %v402, %v414
      %v416 = vmul.f32 %v403, %v414
      %417 = vrot.lane.b32.xlu0 %v415, 17
      %v418 = vpop.permute.xlu0 %417
      %419 = vrot.lane.b32.xlu0 %v416, 17
      %v420 = vpop.permute.xlu0 %419
      %v421 = vlaneseq
      %v422 = vand.u32 %v421, 127
      %vm423 = vcmp.lt.s32.totalorder %v422, 17
      %v424 = vsel %vm423, %v418, %v420
      %v425 = vsel %vm423, %v420, %v418
      %v426 = vperm.slane %v380, 0
      %v427 = vperm.slane %v381, 0
      %v428 = vmul.f32 %v425, %v426
      %v429 = vmul.f32 %v424, %v427
      %430 = vrot.lane.b32.xlu0 %v415, 16
      %v431 = vpop.permute.xlu0 %430
      %432 = vrot.lane.b32.xlu0 %v416, 16
      %v433 = vpop.permute.xlu0 %432
      %vm434 = vcmp.lt.s32.totalorder %v422, 16
      %v435 = vsel %vm434, %v431, %v433
      %v436 = vsel %vm434, %v433, %v431
      %v437 = vperm.slane %v380, 1
      %v438 = vperm.slane %v381, 1
      %v439 = vmul.f32 %v436, %v437
      %v440 = vmul.f32 %v435, %v438
      %441 = vrot.lane.b32.xlu0 %v415, 15
      %v442 = vpop.permute.xlu0 %441
      %443 = vrot.lane.b32.xlu0 %v416, 15
      %v444 = vpop.permute.xlu0 %443
      %vm445 = vcmp.lt.s32.totalorder %v422, 15
      %v446 = vsel %vm445, %v442, %v444
      %v447 = vsel %vm445, %v444, %v442
      %v448 = vperm.slane %v380, 2
      %v449 = vperm.slane %v381, 2
      %v450 = vmul.f32 %v447, %v448
      %v451 = vmul.f32 %v446, %v449
      %452 = vrot.lane.b32.xlu0 %v415, 1
      %v453 = vpop.permute.xlu0 %452
      %454 = vrot.lane.b32.xlu0 %v416, 1
      %v455 = vpop.permute.xlu0 %454
      %vm456 = vcmp.lt.s32.totalorder %v422, 1
      %v457 = vsel %vm456, %v453, %v455
      %v458 = vsel %vm456, %v455, %v453
      %v459 = vperm.slane %v380, 3
      %v460 = vperm.slane %v381, 3
      %v461 = vmul.f32 %v458, %v459
      %v462 = vmul.f32 %v457, %v460
      %463 = vrot.lane.b32.xlu0 %v415, 127
      %v464 = vpop.permute.xlu0 %463
      %465 = vrot.lane.b32.xlu0 %v416, 127
      %v466 = vpop.permute.xlu0 %465
      %vm467 = vcmp.lt.s32.totalorder %v422, 127
      %v468 = vsel %vm467, %v464, %v466
      %v469 = vsel %vm467, %v466, %v464
      %v470 = vperm.slane %v380, 5
      %v471 = vperm.slane %v381, 5
      %v472 = vmul.f32 %v468, %v470
      %v473 = vmul.f32 %v469, %v471
      %474 = vrot.lane.b32.xlu0 %v415, 113
      %v475 = vpop.permute.xlu0 %474
      %476 = vrot.lane.b32.xlu0 %v416, 113
      %v477 = vpop.permute.xlu0 %476
      %vm478 = vcmp.lt.s32.totalorder %v422, 113
      %v479 = vsel %vm478, %v475, %v477
      %v480 = vsel %vm478, %v477, %v475
      %v481 = vperm.slane %v380, 6
      %v482 = vperm.slane %v381, 6
      %v483 = vmul.f32 %v479, %v481
      %v484 = vmul.f32 %v480, %v482
      %485 = vrot.lane.b32.xlu0 %v415, 112
      %v486 = vpop.permute.xlu0 %485
      %487 = vrot.lane.b32.xlu0 %v416, 112
      %v488 = vpop.permute.xlu0 %487
      %vm489 = vcmp.lt.s32.totalorder %v422, 112
      %v490 = vsel %vm489, %v486, %v488
      %v491 = vsel %vm489, %v488, %v486
      %v492 = vperm.slane %v380, 7
      %v493 = vperm.slane %v381, 7
      %v494 = vmul.f32 %v490, %v492
      %v495 = vmul.f32 %v491, %v493
      %496 = vrot.lane.b32.xlu0 %v415, 111
      %v497 = vpop.permute.xlu0 %496
      %498 = vrot.lane.b32.xlu0 %v416, 111
      %v499 = vpop.permute.xlu0 %498
      %vm500 = vcmp.lt.s32.totalorder %v422, 111
      %v501 = vsel %vm500, %v497, %v499
      %v502 = vsel %vm500, %v499, %v497
      %v503 = vperm.slane %v382, 0
      %v504 = vperm.slane %v383, 0
      %v505 = vmul.f32 %v501, %v503
      %v506 = vmul.f32 %v502, %v504
      %v507 = vpack.c.bf16 %v439, %v428
      %v508 = vpack.c.bf16 %v440, %v429
      %v509 = vpack.c.bf16 %v461, %v450
      %v510 = vpack.c.bf16 %v462, %v451
      %v511 = vpack.c.bf16 %v472, %v415
      %v512 = vpack.c.bf16 %v473, %v416
      %v513 = vpack.c.bf16 %v494, %v483
      %v514 = vpack.c.bf16 %v495, %v484
      %v515 = vpack.c.bf16 %v505, %v505
      %v516 = vpack.c.bf16 %v506, %v506
      %518 = vset.pattern.permute.xlu0 0
      %519 = vperm.xlu0 %518, %v375
      %v520 = vpop.permute.xlu0 %519
      %vm522 = vcmask 588800
      %v524 = vsel %vm522, %v374, 0
      %vm526 = vcmask 1043456
      %v528 = vsel %vm526, %v515, 0
      %v531 = vsel %vm526, %v516, 0
      %533 = vmatpush.bf16.msra.mxu0 0
      %534 = vmatpush.bf16.msra.mxu0 0
      %535 = vmatpush.bf16.msra.mxu0 0
      %536 = vmatpush.bf16.msra.mxu0 %v528
      %537 = vmatpush.bf16.msra.mxu0 %v513
      %538 = vmatpush.bf16.msra.mxu0 %v511
      %539 = vmatpush.bf16.msra.mxu0 %v509
      %540 = vmatpush.bf16.msra.mxu0 %v507
      %541 = vmatmul.bf16.gmra.mxu0 %v524
      %v542 = vpop.f32.mrf.mxu0
      %v543 = vadd.f32 %v520, %v542
      %v544 = vpop.f32.mrf.mxu0
      %545 = vdwg.mxu0
      %546 = vmatpush.bf16.msra.mxu0 0
      %547 = vmatpush.bf16.msra.mxu0 0
      %548 = vmatpush.bf16.msra.mxu0 0
      %549 = vmatpush.bf16.msra.mxu0 %v531
      %550 = vmatpush.bf16.msra.mxu0 %v514
      %551 = vmatpush.bf16.msra.mxu0 %v512
      %552 = vmatpush.bf16.msra.mxu0 %v510
      %553 = vmatpush.bf16.msra.mxu0 %v508
      %554 = vmatmul.bf16.gmra.mxu0 %v524
      %v555 = vpop.f32.mrf.mxu0
      %v556 = vadd.f32 %v520, %v555
      %v557 = vpop.f32.mrf.mxu0
      %558 = vdwg.mxu0
      %vm559 = vcmp.ge.f32.partialorder %v543, 0.0
      %vm560 = vcmp.ge.f32.partialorder %v556, 0.0
      %v561 = vmul.f32 %v543, 0.2
      %v562 = vmul.f32 %v556, 0.2
      %v563 = vsel %vm559, %v543, %v561
      %v564 = vsel %vm560, %v556, %v562
      %v565 = vadd.f32 %v563, %v564
      %566 = vadd.xlane.f32.xlu0 %v565
      %v567 = vpop.xlane.xlu0 %566
      %v568 = vmul.f32 %v567, 0.00390625
      %v569 = vmul.f32 %v563, %v563
      %v570 = vmul.f32 %v564, %v564
      %v571 = vadd.f32 %v569, %v570
      %572 = vadd.xlane.f32.xlu0 %v571
      %v573 = vpop.xlane.xlu0 %572
      %v574 = vmul.f32 %v573, 0.00390625
      %v575 = vmul.f32 %v568, %v568
      %v576 = vsub.f32 %v574, %v575
      %v577 = vsub.f32 %v563, %v568
      %v578 = vsub.f32 %v564, %v568
      %v579 = vadd.f32 %v576, 1e-05
      %v580 = vrsqrt.pop %v579
      %v581 = vmul.f32 %v580, %v579
      %v582 = vmul.f32 %v581, %v580
      %v583 = vmul.f32 0.5, %v582
      %v584 = vsub.f32 1.5, %v583
      %v585 = vmul.f32 %v580, %v584
      %vm586 = vweird.f32 %v579
      %vm587 = vweird.f32 %v580
      %vm588 = vmor %vm586, %vm587
      %v589 = vsel %vm588, %v580, %v585
      %v590 = vmul.f32 %v577, %v589
      %v591 = vmul.f32 %v578, %v589
      %592 = vrot.lane.b32.xlu0 %v590, 17
      %v593 = vpop.permute.xlu0 %592
      %594 = vrot.lane.b32.xlu0 %v591, 17
      %v595 = vpop.permute.xlu0 %594
      %v596 = vsel %vm423, %v593, %v595
      %v597 = vsel %vm423, %v595, %v593
      %v598 = vmul.f32 %v597, %v426
      %v599 = vmul.f32 %v596, %v427
      %600 = vrot.lane.b32.xlu0 %v590, 16
      %v601 = vpop.permute.xlu0 %600
      %602 = vrot.lane.b32.xlu0 %v591, 16
      %v603 = vpop.permute.xlu0 %602
      %v604 = vsel %vm434, %v601, %v603
      %v605 = vsel %vm434, %v603, %v601
      %v606 = vmul.f32 %v605, %v437
      %v607 = vmul.f32 %v604, %v438
      %608 = vrot.lane.b32.xlu0 %v590, 15
      %v609 = vpop.permute.xlu0 %608
      %610 = vrot.lane.b32.xlu0 %v591, 15
      %v611 = vpop.permute.xlu0 %610
      %v612 = vsel %vm445, %v609, %v611
      %v613 = vsel %vm445, %v611, %v609
      %v614 = vmul.f32 %v613, %v448
      %v615 = vmul.f32 %v612, %v449
      %616 = vrot.lane.b32.xlu0 %v590, 1
      %v617 = vpop.permute.xlu0 %616
      %618 = vrot.lane.b32.xlu0 %v591, 1
      %v619 = vpop.permute.xlu0 %618
      %v620 = vsel %vm456, %v617, %v619
      %v621 = vsel %vm456, %v619, %v617
      %v622 = vmul.f32 %v621, %v459
      %v623 = vmul.f32 %v620, %v460
      %624 = vrot.lane.b32.xlu0 %v590, 127
      %v625 = vpop.permute.xlu0 %624
      %626 = vrot.lane.b32.xlu0 %v591, 127
      %v627 = vpop.permute.xlu0 %626
      %v628 = vsel %vm467, %v625, %v627
      %v629 = vsel %vm467, %v627, %v625
      %v630 = vmul.f32 %v628, %v470
      %v631 = vmul.f32 %v629, %v471
      %632 = vrot.lane.b32.xlu0 %v590, 113
      %v633 = vpop.permute.xlu0 %632
      %634 = vrot.lane.b32.xlu0 %v591, 113
      %v635 = vpop.permute.xlu0 %634
      %v636 = vsel %vm478, %v633, %v635
      %v637 = vsel %vm478, %v635, %v633
      %v638 = vmul.f32 %v636, %v481
      %v639 = vmul.f32 %v637, %v482
      %640 = vrot.lane.b32.xlu0 %v590, 112
      %v641 = vpop.permute.xlu0 %640
      %642 = vrot.lane.b32.xlu0 %v591, 112
      %v643 = vpop.permute.xlu0 %642
      %v644 = vsel %vm489, %v641, %v643
      %v645 = vsel %vm489, %v643, %v641
      %v646 = vmul.f32 %v644, %v492
      %v647 = vmul.f32 %v645, %v493
      %648 = vrot.lane.b32.xlu0 %v590, 111
      %v649 = vpop.permute.xlu0 %648
      %650 = vrot.lane.b32.xlu0 %v591, 111
      %v651 = vpop.permute.xlu0 %650
      %v652 = vsel %vm500, %v649, %v651
      %v653 = vsel %vm500, %v651, %v649
      %v654 = vmul.f32 %v652, %v503
      %v655 = vmul.f32 %v653, %v504
      %v656 = vpack.c.bf16 %v606, %v598
      %v657 = vpack.c.bf16 %v607, %v599
      %v658 = vpack.c.bf16 %v622, %v614
      %v659 = vpack.c.bf16 %v623, %v615
      %v660 = vpack.c.bf16 %v630, %v590
      %v661 = vpack.c.bf16 %v631, %v591
      %v662 = vpack.c.bf16 %v646, %v638
      %v663 = vpack.c.bf16 %v647, %v639
      %v664 = vpack.c.bf16 %v654, %v654
      %v665 = vpack.c.bf16 %v655, %v655
      %667 = vset.pattern.permute.xlu0 0
      %668 = vperm.xlu0 %667, %v377
      %v669 = vpop.permute.xlu0 %668
      %v672 = vsel %vm522, %v376, 0
      %v675 = vsel %vm526, %v664, 0
      %v678 = vsel %vm526, %v665, 0
      %680 = vmatpush.bf16.msra.mxu0 0
      %681 = vmatpush.bf16.msra.mxu0 0
      %682 = vmatpush.bf16.msra.mxu0 0
      %683 = vmatpush.bf16.msra.mxu0 %v675
      %684 = vmatpush.bf16.msra.mxu0 %v662
      %685 = vmatpush.bf16.msra.mxu0 %v660
      %686 = vmatpush.bf16.msra.mxu0 %v658
      %687 = vmatpush.bf16.msra.mxu0 %v656
      %688 = vmatmul.bf16.gmra.mxu0 %v672
      %v689 = vpop.f32.mrf.mxu0
      %v690 = vadd.f32 %v669, %v689
      %v691 = vpop.f32.mrf.mxu0
      %692 = vdwg.mxu0
      %693 = vmatpush.bf16.msra.mxu0 0
      %694 = vmatpush.bf16.msra.mxu0 0
      %695 = vmatpush.bf16.msra.mxu0 0
      %696 = vmatpush.bf16.msra.mxu0 %v678
      %697 = vmatpush.bf16.msra.mxu0 %v663
      %698 = vmatpush.bf16.msra.mxu0 %v661
      %699 = vmatpush.bf16.msra.mxu0 %v659
      %700 = vmatpush.bf16.msra.mxu0 %v657
      %701 = vmatmul.bf16.gmra.mxu0 %v672
      %v702 = vpop.f32.mrf.mxu0
      %v703 = vadd.f32 %v669, %v702
      %v704 = vpop.f32.mrf.mxu0
      %705 = vdwg.mxu0
      %vm706 = vcmp.ge.f32.partialorder %v690, 0.0
      %vm707 = vcmp.ge.f32.partialorder %v703, 0.0
      %v708 = vmul.f32 %v690, 0.2
      %v709 = vmul.f32 %v703, 0.2
      %v710 = vsel %vm706, %v690, %v708
      %v711 = vsel %vm707, %v703, %v709
      %712 = vrot.lane.b32.xlu0 %v710, 17
      %v713 = vpop.permute.xlu0 %712
      %714 = vrot.lane.b32.xlu0 %v711, 17
      %v715 = vpop.permute.xlu0 %714
      %v716 = vsel %vm423, %v713, %v715
      %v717 = vsel %vm423, %v715, %v713
      %v718 = vmul.f32 %v717, %v426
      %v719 = vmul.f32 %v716, %v427
      %720 = vrot.lane.b32.xlu0 %v710, 16
      %v721 = vpop.permute.xlu0 %720
      %722 = vrot.lane.b32.xlu0 %v711, 16
      %v723 = vpop.permute.xlu0 %722
      %v724 = vsel %vm434, %v721, %v723
      %v725 = vsel %vm434, %v723, %v721
      %v726 = vmul.f32 %v725, %v437
      %v727 = vmul.f32 %v724, %v438
      %728 = vrot.lane.b32.xlu0 %v710, 15
      %v729 = vpop.permute.xlu0 %728
      %730 = vrot.lane.b32.xlu0 %v711, 15
      %v731 = vpop.permute.xlu0 %730
      %v732 = vsel %vm445, %v729, %v731
      %v733 = vsel %vm445, %v731, %v729
      %v734 = vmul.f32 %v733, %v448
      %v735 = vmul.f32 %v732, %v449
      %736 = vrot.lane.b32.xlu0 %v710, 1
      %v737 = vpop.permute.xlu0 %736
      %738 = vrot.lane.b32.xlu0 %v711, 1
      %v739 = vpop.permute.xlu0 %738
      %v740 = vsel %vm456, %v737, %v739
      %v741 = vsel %vm456, %v739, %v737
      %v742 = vmul.f32 %v741, %v459
      %v743 = vmul.f32 %v740, %v460
      %744 = vrot.lane.b32.xlu0 %v710, 127
      %v745 = vpop.permute.xlu0 %744
      %746 = vrot.lane.b32.xlu0 %v711, 127
      %v747 = vpop.permute.xlu0 %746
      %v748 = vsel %vm467, %v745, %v747
      %v749 = vsel %vm467, %v747, %v745
      %v750 = vmul.f32 %v748, %v470
      %v751 = vmul.f32 %v749, %v471
      %752 = vrot.lane.b32.xlu0 %v710, 113
      %v753 = vpop.permute.xlu0 %752
      %754 = vrot.lane.b32.xlu0 %v711, 113
      %v755 = vpop.permute.xlu0 %754
      %v756 = vsel %vm478, %v753, %v755
      %v757 = vsel %vm478, %v755, %v753
      %v758 = vmul.f32 %v756, %v481
      %v759 = vmul.f32 %v757, %v482
      %760 = vrot.lane.b32.xlu0 %v710, 112
      %v761 = vpop.permute.xlu0 %760
      %762 = vrot.lane.b32.xlu0 %v711, 112
      %v763 = vpop.permute.xlu0 %762
      %v764 = vsel %vm489, %v761, %v763
      %v765 = vsel %vm489, %v763, %v761
      %v766 = vmul.f32 %v764, %v492
      %v767 = vmul.f32 %v765, %v493
      %768 = vrot.lane.b32.xlu0 %v710, 111
      %v769 = vpop.permute.xlu0 %768
      %770 = vrot.lane.b32.xlu0 %v711, 111
      %v771 = vpop.permute.xlu0 %770
      %v772 = vsel %vm500, %v769, %v771
      %v773 = vsel %vm500, %v771, %v769
      %v774 = vmul.f32 %v772, %v503
      %v775 = vmul.f32 %v773, %v504
      %v776 = vpack.c.bf16 %v726, %v718
      %v777 = vpack.c.bf16 %v727, %v719
      %v778 = vpack.c.bf16 %v742, %v734
      %v779 = vpack.c.bf16 %v743, %v735
      %v780 = vpack.c.bf16 %v750, %v710
      %v781 = vpack.c.bf16 %v751, %v711
      %v782 = vpack.c.bf16 %v766, %v758
      %v783 = vpack.c.bf16 %v767, %v759
      %v784 = vpack.c.bf16 %v774, %v774
      %v785 = vpack.c.bf16 %v775, %v775
      %787 = vset.pattern.permute.xlu0 0
      %788 = vperm.xlu0 %787, %v379
      %v789 = vpop.permute.xlu0 %788
      %v792 = vsel %vm522, %v378, 0
      %v795 = vsel %vm526, %v784, 0
      %v798 = vsel %vm526, %v785, 0
      %800 = vmatpush.bf16.msra.mxu0 0
      %801 = vmatpush.bf16.msra.mxu0 0
      %802 = vmatpush.bf16.msra.mxu0 0
      %803 = vmatpush.bf16.msra.mxu0 %v795
      %804 = vmatpush.bf16.msra.mxu0 %v782
      %805 = vmatpush.bf16.msra.mxu0 %v780
      %806 = vmatpush.bf16.msra.mxu0 %v778
      %807 = vmatpush.bf16.msra.mxu0 %v776
      %808 = vmatmul.bf16.gmra.mxu0 %v792
      %v809 = vpop.f32.mrf.mxu0
      %v810 = vadd.f32 %v789, %v809
      %v811 = vpop.f32.mrf.mxu0
      %812 = vdwg.mxu0
      %813 = vmatpush.bf16.msra.mxu0 0
      %814 = vmatpush.bf16.msra.mxu0 0
      %815 = vmatpush.bf16.msra.mxu0 0
      %816 = vmatpush.bf16.msra.mxu0 %v798
      %817 = vmatpush.bf16.msra.mxu0 %v783
      %818 = vmatpush.bf16.msra.mxu0 %v781
      %819 = vmatpush.bf16.msra.mxu0 %v779
      %820 = vmatpush.bf16.msra.mxu0 %v777
      %821 = vmatmul.bf16.gmra.mxu0 %v792
      %v822 = vpop.f32.mrf.mxu0
      %v823 = vadd.f32 %v789, %v822
      %v824 = vpop.f32.mrf.mxu0
      %825 = vdwg.mxu0
      %826 = vst [vmem:[%s367] sm:$0xff] %v810
      %827 = vst [vmem:[%s367 + $0x8] sm:$0xff] %v823
      %828 = vrot.lane.b32.xlu0 %v810, 127
      %v829 = vpop.permute.xlu0 %828
      %830 = vrot.lane.b32.xlu0 %v823, 127
      %v831 = vpop.permute.xlu0 %830
      %v832 = vsel %vm467, %v829, %v831
      %v833 = vsel %vm467, %v831, %v829
      %v834 = vadd.f32 %v810, %v832
      %v835 = vadd.f32 %v823, %v833
      %836 = vrot.lane.b32.xlu0 %v834, 112
      %v837 = vpop.permute.xlu0 %836
      %838 = vrot.lane.b32.xlu0 %v835, 112
      %v839 = vpop.permute.xlu0 %838
      %v840 = vsel %vm489, %v837, %v839
      %v841 = vsel %vm489, %v839, %v837
      %v842 = vadd.f32 %v834, %v840
      %v843 = vadd.f32 %v835, %v841
      %v844 = vmul.f32 %v842, 0.25
      %v845 = vmul.f32 %v843, 0.25
      %846 = vrot.lane.b32.xlu0 %v844, 34
      %v847 = vpop.permute.xlu0 %846
      %848 = vrot.lane.b32.xlu0 %v845, 34
      %v849 = vpop.permute.xlu0 %848
      %vm850 = vcmp.lt.s32.totalorder %v422, 34
      %v851 = vsel %vm850, %v847, %v849
      %v852 = vsel %vm850, %v849, %v847
      %v853 = vperm.slane %v384, 0
      %v854 = vperm.slane %v385, 0
      %v855 = vmul.f32 %v852, %v853
      %v856 = vmul.f32 %v851, %v854
      %857 = vrot.lane.b32.xlu0 %v844, 32
      %v858 = vpop.permute.xlu0 %857
      %859 = vrot.lane.b32.xlu0 %v845, 32
      %v860 = vpop.permute.xlu0 %859
      %vm861 = vcmp.lt.s32.totalorder %v422, 32
      %v862 = vsel %vm861, %v858, %v860
      %v863 = vsel %vm861, %v860, %v858
      %v864 = vperm.slane %v384, 1
      %v865 = vperm.slane %v385, 1
      %v866 = vmul.f32 %v863, %v864
      %v867 = vmul.f32 %v862, %v865
      %868 = vrot.lane.b32.xlu0 %v844, 30
      %v869 = vpop.permute.xlu0 %868
      %870 = vrot.lane.b32.xlu0 %v845, 30
      %v871 = vpop.permute.xlu0 %870
      %vm872 = vcmp.lt.s32.totalorder %v422, 30
      %v873 = vsel %vm872, %v869, %v871
      %v874 = vsel %vm872, %v871, %v869
      %v875 = vperm.slane %v384, 2
      %v876 = vperm.slane %v385, 2
      %v877 = vmul.f32 %v874, %v875
      %v878 = vmul.f32 %v873, %v876
      %879 = vrot.lane.b32.xlu0 %v844, 2
      %v880 = vpop.permute.xlu0 %879
      %881 = vrot.lane.b32.xlu0 %v845, 2
      %v882 = vpop.permute.xlu0 %881
      %vm883 = vcmp.lt.s32.totalorder %v422, 2
      %v884 = vsel %vm883, %v880, %v882
      %v885 = vsel %vm883, %v882, %v880
      %v886 = vperm.slane %v384, 3
      %v887 = vperm.slane %v385, 3
      %v888 = vmul.f32 %v885, %v886
      %v889 = vmul.f32 %v884, %v887
      %890 = vrot.lane.b32.xlu0 %v844, 126
      %v891 = vpop.permute.xlu0 %890
      %892 = vrot.lane.b32.xlu0 %v845, 126
      %v893 = vpop.permute.xlu0 %892
      %vm894 = vcmp.lt.s32.totalorder %v422, 126
      %v895 = vsel %vm894, %v891, %v893
      %v896 = vsel %vm894, %v893, %v891
      %v897 = vperm.slane %v384, 5
      %v898 = vperm.slane %v385, 5
      %v899 = vmul.f32 %v895, %v897
      %v900 = vmul.f32 %v896, %v898
      %901 = vrot.lane.b32.xlu0 %v844, 98
      %v902 = vpop.permute.xlu0 %901
      %903 = vrot.lane.b32.xlu0 %v845, 98
      %v904 = vpop.permute.xlu0 %903
      %vm905 = vcmp.lt.s32.totalorder %v422, 98
      %v906 = vsel %vm905, %v902, %v904
      %v907 = vsel %vm905, %v904, %v902
      %v908 = vperm.slane %v384, 6
      %v909 = vperm.slane %v385, 6
      %v910 = vmul.f32 %v906, %v908
      %v911 = vmul.f32 %v907, %v909
      %912 = vrot.lane.b32.xlu0 %v844, 96
      %v913 = vpop.permute.xlu0 %912
      %914 = vrot.lane.b32.xlu0 %v845, 96
      %v915 = vpop.permute.xlu0 %914
      %vm916 = vcmp.lt.s32.totalorder %v422, 96
      %v917 = vsel %vm916, %v913, %v915
      %v918 = vsel %vm916, %v915, %v913
      %v919 = vperm.slane %v384, 7
      %v920 = vperm.slane %v385, 7
      %v921 = vmul.f32 %v917, %v919
      %v922 = vmul.f32 %v918, %v920
      %923 = vrot.lane.b32.xlu0 %v844, 94
      %v924 = vpop.permute.xlu0 %923
      %925 = vrot.lane.b32.xlu0 %v845, 94
      %v926 = vpop.permute.xlu0 %925
      %vm927 = vcmp.lt.s32.totalorder %v422, 94
      %v928 = vsel %vm927, %v924, %v926
      %v929 = vsel %vm927, %v926, %v924
      %v930 = vperm.slane %v386, 0
      %v931 = vperm.slane %v387, 0
      %v932 = vmul.f32 %v928, %v930
      %v933 = vmul.f32 %v929, %v931
      %v934 = vpack.c.bf16 %v866, %v855
      %v935 = vpack.c.bf16 %v867, %v856
      %v936 = vpack.c.bf16 %v888, %v877
      %v937 = vpack.c.bf16 %v889, %v878
      %v938 = vpack.c.bf16 %v899, %v844
      %v939 = vpack.c.bf16 %v900, %v845
      %v940 = vpack.c.bf16 %v921, %v910
      %v941 = vpack.c.bf16 %v922, %v911
      %v942 = vpack.c.bf16 %v932, %v932
      %v943 = vpack.c.bf16 %v933, %v933
      %v945 = vsel %vm526, %v942, 0
      %v948 = vsel %vm526, %v943, 0
      %950 = vmatpush.bf16.msra.mxu0 0
      %951 = vmatpush.bf16.msra.mxu0 0
      %952 = vmatpush.bf16.msra.mxu0 0
      %953 = vmatpush.bf16.msra.mxu0 %v945
      %954 = vmatpush.bf16.msra.mxu0 %v940
      %955 = vmatpush.bf16.msra.mxu0 %v938
      %956 = vmatpush.bf16.msra.mxu0 %v936
      %957 = vmatpush.bf16.msra.mxu0 %v934
      %958 = vmatmul.bf16.gmra.mxu0 %v792
      %v959 = vpop.f32.mrf.mxu0
      %v960 = vadd.f32 %v789, %v959
      %v961 = vpop.f32.mrf.mxu0
      %962 = vdwg.mxu0
      %963 = vmatpush.bf16.msra.mxu0 0
      %964 = vmatpush.bf16.msra.mxu0 0
      %965 = vmatpush.bf16.msra.mxu0 0
      %966 = vmatpush.bf16.msra.mxu0 %v948
      %967 = vmatpush.bf16.msra.mxu0 %v941
      %968 = vmatpush.bf16.msra.mxu0 %v939
      %969 = vmatpush.bf16.msra.mxu0 %v937
      %970 = vmatpush.bf16.msra.mxu0 %v935
      %971 = vmatmul.bf16.gmra.mxu0 %v792
      %v972 = vpop.f32.mrf.mxu0
      %v973 = vadd.f32 %v789, %v972
      %v974 = vpop.f32.mrf.mxu0
      %975 = vdwg.mxu0
      %976 = vst [vmem:[%s372] sm:$0xff] %v960
      %977 = vst [vmem:[%s372 + $0x8] sm:$0xff] %v973
      %p978 = scmp.lt.s32.totalorder %s22, 1
      %s979 = scalar_select %p978, %s22, 1
      %s980 = smul.addr %s979, 2
      %s981 = smul.addr %s980, 8
      %s982 = scalar_lea.vmem %s9, %s981
      %p983 = scmp.lt.s32.totalorder %s22, 1
      %s984 = scalar_select %p983, %s22, 1
      %s985 = smul.addr %s984, 2
      %s986 = smul.addr %s985, 8
      %s987 = scalar_lea.vmem %s10, %s986
      // Predicated region
      $region57: #{unet_enc_block_forward.1} parent=55 // pred_check
        %p988 = pneg %p234
      $region58: #{unet_enc_block_forward.1} parent=55 // pred_check_branch
        %990 = sbr.rel (%p988) target = $region60
      $region59: #{unet_enc_block_forward.1} parent=55 // pred_region
        _
      $region60: #{unet_enc_block_forward.1} parent=55 // pred_fallthru
        _
      // Predicated region
      $region61: #{unet_enc_block_forward.1} parent=55 // pred_check
        %p991 = pneg %p260
      $region62: #{unet_enc_block_forward.1} parent=55 // pred_check_branch
        %993 = sbr.rel (%p991) target = $region64
      $region63: #{unet_enc_block_forward.1} parent=55 // pred_region
        _
      $region64: #{unet_enc_block_forward.1} parent=55 // pred_fallthru
        _
    $region56: #{unet_enc_block_forward.1} parent=5 // pred_fallthru
      _
    %p994 = scmp.le.s32.totalorder 2, %s17
    // Predicated region
    $region65: #{unet_enc_block_forward.1} parent=5 // pred_check
      %p995 = pneg %p994
    $region66: #{unet_enc_block_forward.1} parent=5 // pred_check_branch
      %997 = sbr.rel (%p995) target = $region68
    $region67: #{unet_enc_block_forward.1} parent=5 // pred_region
      %s998 = ssub.s32 %s17, 2
      // Predicated region
      $region69: #{unet_enc_block_forward.1} parent=67 // pred_check
        %p999 = pneg %p240
      $region70: #{unet_enc_block_forward.1} parent=67 // pred_check_branch
        %1001 = sbr.rel (%p999) target = $region72
      $region71: #{unet_enc_block_forward.1} parent=67 // pred_region
        %p1002 = scmp.lt.s32.totalorder %s23, 1
        %s1003 = scalar_select %p1002, %s23, 1
        %s1004 = smul.addr %s1003, 2
        %s1005 = smul.addr %s1004, 8
        %s1006 = scalar_lea.vmem %s9, %s1005
      $region72: #{unet_enc_block_forward.1} parent=67 // pred_fallthru
        _
      // Predicated region
      $region73: #{unet_enc_block_forward.1} parent=67 // pred_check
        %p1007 = pneg %p266
      $region74: #{unet_enc_block_forward.1} parent=67 // pred_check_branch
        %1009 = sbr.rel (%p1007) target = $region76
      $region75: #{unet_enc_block_forward.1} parent=67 // pred_region
        %p1010 = scmp.lt.s32.totalorder %s23, 1
        %s1011 = scalar_select %p1010, %s23, 1
        %s1012 = smul.addr %s1011, 2
        %s1013 = smul.addr %s1012, 8
        %s1014 = scalar_lea.vmem %s10, %s1013
      $region76: #{unet_enc_block_forward.1} parent=67 // pred_fallthru
        _
    $region68: #{unet_enc_block_forward.1} parent=5 // pred_fallthru
      _
  $region6: #{unet_enc_block_forward.1} parent=0 // loop_footer
    %s21 = sadd.s32 1, %s17
  $region7: #{unet_enc_block_forward.1} parent=0 // loop_footer_branch
    %16 = sbr.rel target = $region3
  $region8: #{unet_enc_block_forward.1} parent=0 // loop_exit
    _

</llo_original>
